<compile_context>
chip_gen: v7x
topology: tpu7x:2x2x1
jax: 0.10.0
libtpu: 0.0.40
codegen_flags: <defaults>
</compile_context>

<pallas_src>
import jax
import jax.numpy as jnp
from jax.experimental import pallas as pl
from jax.experimental.pallas import tpu as pltpu

F = 28 * 28  # flattened feature dim


def _round_up(x, m):
    return (x + m - 1) // m * m


def _has_bf16_eup():
    """True on generations with a bf16 EUP path (v6e / v7x); False on <= v5."""
    try:
        kind = jax.devices()[0].device_kind.lower()
    except Exception:
        return False
    return not any(t in kind for t in ("v2", "v3", "v4", "v5"))


# ----------------------------------------------------------------------------
# Kernel: fused 5-matmul MLP (layers 3+4 pre-folded) over one (TB, 784) tile.
# All weights/biases stay VMEM-resident across grid steps (constant index_map).
# ----------------------------------------------------------------------------
def _make_kernel(use_bf16_exp):
    def kernel(
        x_ref,
        w1_ref, b1_ref, w2_ref, b2_ref, w34_ref, b34_ref,  # encoder + fused bottleneck
        w5_ref, b5_ref, w6_ref, b6_ref,                     # decoder tail
        o_ref,
    ):
        def linear(h_f32, w_ref, b_ref):
            # bf16 x bf16 matmul on the MXU, f32 accumulate, f32 bias add.
            return (
                jnp.dot(
                    h_f32.astype(jnp.bfloat16),
                    w_ref[...],
                    preferred_element_type=jnp.float32,
                )
                + b_ref[...]
            )

        h = x_ref[...]                                   # (TB, 784) f32

        h = jnp.maximum(linear(h, w1_ref, b1_ref), 0.0)  # (TB, 128) ReLU
        h = jnp.maximum(linear(h, w2_ref, b2_ref), 0.0)  # (TB, 64)  ReLU
        # Folded Linear(64,32) @ Linear(32,64): exact (no nonlinearity between).
        h = jnp.maximum(linear(h, w34_ref, b34_ref), 0.0)  # (TB, 64) ReLU
        h = jnp.maximum(linear(h, w5_ref, b5_ref), 0.0)  # (TB, 128) ReLU
        h = linear(h, w6_ref, b6_ref)                    # (TB, 784)

        # Sigmoid: clamp so exp never produces inf through the approx
        # reciprocal; exp on the EUP (bf16 path on v6e/v7x), approx reciprocal
        # also on the EUP -> VALU stays free.
        neg_h = -jnp.clip(h, -30.0, 30.0)
        if use_bf16_exp:
            e = jnp.exp(neg_h.astype(jnp.bfloat16)).astype(jnp.float32)
        else:
            e = jnp.exp(neg_h)
        o_ref[...] = pl.reciprocal(1.0 + e, approx=True).astype(o_ref.dtype)

    return kernel


# ----------------------------------------------------------------------------
# Param preparation: fold layers 3 & 4 and cast matmul operands to bf16.
# ----------------------------------------------------------------------------
def prepare_kernel_params(params_f32):
    """12-tuple of f32 (in,out)-layout Linear params -> 10-tuple kernel params."""
    (w1, b1, w2, b2, w3, b3, w4, b4, w5, b5, w6, b6) = params_f32
    # No nonlinearity between layer 3 and layer 4 -> exact fusion (in f32).
    w34 = jnp.dot(w3, w4)            # (64, 64)
    b34 = jnp.dot(b3, w4) + b4       # (1, 64)

    def W(w):
        return w.astype(jnp.bfloat16)

    return (W(w1), b1, W(w2), b2, W(w34), b34, W(w5), b5, W(w6), b6)


# ----------------------------------------------------------------------------
# Wrapper
# ----------------------------------------------------------------------------
def autoencoder_forward(x_nchw, kernel_params, *, batch_tile=512,
                        out_dtype=jnp.float32):
    """x_nchw: (B, 1, 28, 28) float32 -> (B, 1, 28, 28) out_dtype."""
    B = x_nchw.shape[0]
    x_flat = x_nchw.reshape(B, F).astype(jnp.float32)    # nn.Flatten()

    (w1, b1, w2, b2, w34, b34, w5, b5, w6, b6) = kernel_params

    # --- batch tile selection ------------------------------------------------
    # Large batches: 512-row tiles (>=85% of HBM roofline, fits v5e's budget
    # once vmem_limit_bytes is set).  Small batches: split into two even steps
    # so both v7x TensorCores get work; never below 8 rows (sublane granule).
    B8 = _round_up(B, 8)
    if B8 <= batch_tile:
        tb = max(8, _round_up(-(-B8 // 2), 8))
    else:
        tb = batch_tile
    Bp = _round_up(B, tb)
    if Bp != B:
        x_flat = jnp.pad(x_flat, ((0, Bp - B), (0, 0)))

    grid = (Bp // tb,)

    # --- VMEM budget (explicit, sized to the tile) ---------------------------
    out_itemsize = jnp.dtype(out_dtype).itemsize
    act = tb * F
    vmem_limit = (
        2 * act * 4              # double-buffered f32 input tile
        + 2 * act * out_itemsize  # double-buffered output tile
        + 4 * act * 4            # in-kernel temporaries (pre-sigmoid f32, bf16 copies)
        + (2 << 20)              # resident bf16 weights + f32 biases (w/ buffering)
    )
    vmem_limit = int(min(_round_up(vmem_limit, 1 << 20) + (2 << 20), 60 << 20))

    # --- specs ---------------------------------------------------------------
    act_spec = pl.BlockSpec((tb, F), lambda i: (i, 0))
    out_spec = pl.BlockSpec((tb, F), lambda i: (i, 0))

    def resident(arr):
        return pl.BlockSpec(arr.shape, lambda i: (0, 0))

    weight_specs = [
        resident(w1), resident(b1), resident(w2), resident(b2),
        resident(w34), resident(b34), resident(w5), resident(b5),
        resident(w6), resident(b6),
    ]

    kernel = _make_kernel(use_bf16_exp=_has_bf16_eup())

    out_flat = pl.pallas_call(
        kernel,
        out_shape=jax.ShapeDtypeStruct((Bp, F), out_dtype),
        grid=grid,
        in_specs=[act_spec] + weight_specs,
        out_specs=out_spec,
        compiler_params=pltpu.CompilerParams(
            dimension_semantics=("parallel",),   # shards batch across TCs on v7x
            vmem_limit_bytes=vmem_limit,
        ),
    )(x_flat, w1, b1, w2, b2, w34, b34, w5, b5, w6, b6)

    out_flat = out_flat[:B]
    return out_flat.reshape(B, 1, 28, 28)                # nn.Unflatten(1,(1,28,28))


# ----------------------------------------------------------------------------
# Synthetic params + pure-JAX f32 reference (PyTorch semantics)
# ----------------------------------------------------------------------------
def init_params(key):
    """Deterministic PyTorch-like uniform fan-in init; f32, (in, out) layout."""
    dims = [(784, 128), (128, 64), (64, 32), (32, 64), (64, 128), (128, 784)]
    params = []
    for (fan_in, fan_out) in dims:
        key, kw, kb = jax.random.split(key, 3)
        bound = 1.0 / jnp.sqrt(jnp.float32(fan_in))
        w = jax.random.uniform(kw, (fan_in, fan_out), jnp.float32, -bound, bound)
        b = jax.random.uniform(kb, (1, fan_out), jnp.float32, -bound, bound)
        params.extend([w, b])
    return tuple(params)


def _reference_forward(x_nchw, params_f32):
    """Pure-JAX f32 reference matching the PyTorch module exactly."""
    (w1, b1, w2, b2, w3, b3, w4, b4, w5, b5, w6, b6) = params_f32
    h = x_nchw.reshape(x_nchw.shape[0], -1).astype(jnp.float32)
    h = jax.nn.relu(h @ w1 + b1)
    h = jax.nn.relu(h @ w2 + b2)
    h = h @ w3 + b3
    h = jax.nn.relu(h @ w4 + b4)
    h = jax.nn.relu(h @ w5 + b5)
    h = jax.nn.sigmoid(h @ w6 + b6)
    return h.reshape(x_nchw.shape[0], 1, 28, 28)


if __name__ == "__main__":
    key = jax.random.PRNGKey(0)
    k_params, k_x = jax.random.split(key)

    params_f32 = init_params(k_params)
    kernel_params = prepare_kernel_params(params_f32)

    B = 8
    x = jax.random.uniform(k_x, (B, 1, 28, 28), jnp.float32)  # NCHW, like PyTorch

    y = autoencoder_forward(x, kernel_params)
    y = jax.block_until_ready(y)

    y_ref = _reference_forward(x, params_f32)
    assert y.shape == (B, 1, 28, 28)
    assert y.dtype == jnp.float32
    # Intentional bf16 MXU operands + fused bottleneck + approx EUP reciprocal
    # vs. a pure-f32 reference -> loosened absolute tolerance on (0,1) outputs.
    assert jnp.allclose(y, y_ref, atol=2e-2, rtol=0.0), "mismatch vs JAX reference"

    print("KERNEL_OK")
</pallas_src>

<mosaic_0001>
module attributes {stable_mosaic.version = 11 : i64} {
  func.func @kernel(%arg0: i32, %arg1: memref<8x784xf32, #tpu.memory_space<vmem>>, %arg2: memref<784x128xbf16, #tpu.memory_space<vmem>>, %arg3: memref<1x128xf32, #tpu.memory_space<vmem>>, %arg4: memref<128x64xbf16, #tpu.memory_space<vmem>>, %arg5: memref<1x64xf32, #tpu.memory_space<vmem>>, %arg6: memref<64x64xbf16, #tpu.memory_space<vmem>>, %arg7: memref<1x64xf32, #tpu.memory_space<vmem>>, %arg8: memref<64x128xbf16, #tpu.memory_space<vmem>>, %arg9: memref<1x128xf32, #tpu.memory_space<vmem>>, %arg10: memref<128x784xbf16, #tpu.memory_space<vmem>>, %arg11: memref<1x784xf32, #tpu.memory_space<vmem>>, %arg12: memref<8x784xf32, #tpu.memory_space<vmem>>) attributes {dimension_semantics = [#tpu.dimension_semantics<parallel>], iteration_bounds = array<i64: 1>, scalar_prefetch = 0 : i64, scratch_operands = 0 : i64, tpu.core_type = #tpu.core_type<tc>, window_params = [{transform_indices = @transform_0, window_bounds = array<i64: 8, 784>}, {pipeline_mode = #tpu.pipeline_mode<synchronous>, transform_indices = @transform_1, window_bounds = array<i64: 784, 128>}, {pipeline_mode = #tpu.pipeline_mode<synchronous>, transform_indices = @transform_2, window_bounds = array<i64: 1, 128>}, {pipeline_mode = #tpu.pipeline_mode<synchronous>, transform_indices = @transform_3, window_bounds = array<i64: 128, 64>}, {pipeline_mode = #tpu.pipeline_mode<synchronous>, transform_indices = @transform_4, window_bounds = array<i64: 1, 64>}, {pipeline_mode = #tpu.pipeline_mode<synchronous>, transform_indices = @transform_5, window_bounds = array<i64: 64, 64>}, {pipeline_mode = #tpu.pipeline_mode<synchronous>, transform_indices = @transform_6, window_bounds = array<i64: 1, 64>}, {pipeline_mode = #tpu.pipeline_mode<synchronous>, transform_indices = @transform_7, window_bounds = array<i64: 64, 128>}, {pipeline_mode = #tpu.pipeline_mode<synchronous>, transform_indices = @transform_8, window_bounds = array<i64: 1, 128>}, {pipeline_mode = #tpu.pipeline_mode<synchronous>, transform_indices = @transform_9, window_bounds = array<i64: 128, 784>}, {pipeline_mode = #tpu.pipeline_mode<synchronous>, transform_indices = @transform_10, window_bounds = array<i64: 1, 784>}, {transform_indices = @transform_11, window_bounds = array<i64: 8, 784>}]} {
    %c0 = arith.constant 0 : index
    %c0_0 = arith.constant 0 : index
    %0 = vector.load %arg1[%c0, %c0_0] : memref<8x784xf32, #tpu.memory_space<vmem>>, vector<8x784xf32>
    %1 = arith.truncf %0 : vector<8x784xf32> to vector<8x784xbf16>
    %c0_1 = arith.constant 0 : index
    %c0_2 = arith.constant 0 : index
    %2 = vector.load %arg2[%c0_1, %c0_2] : memref<784x128xbf16, #tpu.memory_space<vmem>>, vector<784x128xbf16>
    %cst = arith.constant dense<0.000000e+00> : vector<8x128xf32>
    %3 = tpu.matmul %1, %2, %cst {dimension_numbers = #tpu.dot_dimension_numbers<[1], [0], [0], [1], [0, 0, 1, 1], [], []>} : vector<8x784xbf16>, vector<784x128xbf16>, vector<8x128xf32> -> vector<8x128xf32>
    %c0_3 = arith.constant 0 : index
    %c0_4 = arith.constant 0 : index
    %4 = vector.load %arg3[%c0_3, %c0_4] : memref<1x128xf32, #tpu.memory_space<vmem>>, vector<1x128xf32>
    %5 = vector.broadcast %4 : vector<1x128xf32> to vector<8x128xf32>
    %6 = arith.addf %3, %5 : vector<8x128xf32>
    %cst_5 = arith.constant 0.000000e+00 : f32
    %7 = vector.broadcast %cst_5 : f32 to vector<8x128xf32>
    %8 = arith.maximumf %6, %7 : vector<8x128xf32>
    %9 = arith.truncf %8 : vector<8x128xf32> to vector<8x128xbf16>
    %c0_6 = arith.constant 0 : index
    %c0_7 = arith.constant 0 : index
    %10 = vector.load %arg4[%c0_6, %c0_7] : memref<128x64xbf16, #tpu.memory_space<vmem>>, vector<128x64xbf16>
    %cst_8 = arith.constant dense<0.000000e+00> : vector<8x64xf32>
    %11 = tpu.matmul %9, %10, %cst_8 {dimension_numbers = #tpu.dot_dimension_numbers<[1], [0], [0], [1], [0, 0, 1, 1], [], []>} : vector<8x128xbf16>, vector<128x64xbf16>, vector<8x64xf32> -> vector<8x64xf32>
    %c0_9 = arith.constant 0 : index
    %c0_10 = arith.constant 0 : index
    %12 = vector.load %arg5[%c0_9, %c0_10] : memref<1x64xf32, #tpu.memory_space<vmem>>, vector<1x64xf32>
    %13 = vector.broadcast %12 : vector<1x64xf32> to vector<8x64xf32>
    %14 = arith.addf %11, %13 : vector<8x64xf32>
    %cst_11 = arith.constant 0.000000e+00 : f32
    %15 = vector.broadcast %cst_11 : f32 to vector<8x64xf32>
    %16 = arith.maximumf %14, %15 : vector<8x64xf32>
    %17 = arith.truncf %16 : vector<8x64xf32> to vector<8x64xbf16>
    %c0_12 = arith.constant 0 : index
    %c0_13 = arith.constant 0 : index
    %18 = vector.load %arg6[%c0_12, %c0_13] : memref<64x64xbf16, #tpu.memory_space<vmem>>, vector<64x64xbf16>
    %cst_14 = arith.constant dense<0.000000e+00> : vector<8x64xf32>
    %19 = tpu.matmul %17, %18, %cst_14 {dimension_numbers = #tpu.dot_dimension_numbers<[1], [0], [0], [1], [0, 0, 1, 1], [], []>} : vector<8x64xbf16>, vector<64x64xbf16>, vector<8x64xf32> -> vector<8x64xf32>
    %c0_15 = arith.constant 0 : index
    %c0_16 = arith.constant 0 : index
    %20 = vector.load %arg7[%c0_15, %c0_16] : memref<1x64xf32, #tpu.memory_space<vmem>>, vector<1x64xf32>
    %21 = vector.broadcast %20 : vector<1x64xf32> to vector<8x64xf32>
    %22 = arith.addf %19, %21 : vector<8x64xf32>
    %cst_17 = arith.constant 0.000000e+00 : f32
    %23 = vector.broadcast %cst_17 : f32 to vector<8x64xf32>
    %24 = arith.maximumf %22, %23 : vector<8x64xf32>
    %25 = arith.truncf %24 : vector<8x64xf32> to vector<8x64xbf16>
    %c0_18 = arith.constant 0 : index
    %c0_19 = arith.constant 0 : index
    %26 = vector.load %arg8[%c0_18, %c0_19] : memref<64x128xbf16, #tpu.memory_space<vmem>>, vector<64x128xbf16>
    %cst_20 = arith.constant dense<0.000000e+00> : vector<8x128xf32>
    %27 = tpu.matmul %25, %26, %cst_20 {dimension_numbers = #tpu.dot_dimension_numbers<[1], [0], [0], [1], [0, 0, 1, 1], [], []>} : vector<8x64xbf16>, vector<64x128xbf16>, vector<8x128xf32> -> vector<8x128xf32>
    %c0_21 = arith.constant 0 : index
    %c0_22 = arith.constant 0 : index
    %28 = vector.load %arg9[%c0_21, %c0_22] : memref<1x128xf32, #tpu.memory_space<vmem>>, vector<1x128xf32>
    %29 = vector.broadcast %28 : vector<1x128xf32> to vector<8x128xf32>
    %30 = arith.addf %27, %29 : vector<8x128xf32>
    %cst_23 = arith.constant 0.000000e+00 : f32
    %31 = vector.broadcast %cst_23 : f32 to vector<8x128xf32>
    %32 = arith.maximumf %30, %31 : vector<8x128xf32>
    %33 = arith.truncf %32 : vector<8x128xf32> to vector<8x128xbf16>
    %c0_24 = arith.constant 0 : index
    %c0_25 = arith.constant 0 : index
    %34 = vector.load %arg10[%c0_24, %c0_25] : memref<128x784xbf16, #tpu.memory_space<vmem>>, vector<128x784xbf16>
    %cst_26 = arith.constant dense<0.000000e+00> : vector<8x784xf32>
    %35 = tpu.matmul %33, %34, %cst_26 {dimension_numbers = #tpu.dot_dimension_numbers<[1], [0], [0], [1], [0, 0, 1, 1], [], []>} : vector<8x128xbf16>, vector<128x784xbf16>, vector<8x784xf32> -> vector<8x784xf32>
    %c0_27 = arith.constant 0 : index
    %c0_28 = arith.constant 0 : index
    %36 = vector.load %arg11[%c0_27, %c0_28] : memref<1x784xf32, #tpu.memory_space<vmem>>, vector<1x784xf32>
    %37 = vector.broadcast %36 : vector<1x784xf32> to vector<8x784xf32>
    %38 = arith.addf %35, %37 : vector<8x784xf32>
    %cst_29 = arith.constant -3.000000e+01 : f32
    %cst_30 = arith.constant 3.000000e+01 : f32
    %39 = vector.broadcast %cst_29 : f32 to vector<8x784xf32>
    %40 = arith.maximumf %39, %38 : vector<8x784xf32>
    %41 = vector.broadcast %cst_30 : f32 to vector<8x784xf32>
    %42 = arith.minimumf %41, %40 : vector<8x784xf32>
    %cst_31 = arith.constant 0.000000e+00 : f32
    %43 = vector.broadcast %cst_31 : f32 to vector<8x784xf32>
    %44 = arith.subf %43, %42 : vector<8x784xf32>
    %45 = arith.truncf %44 : vector<8x784xf32> to vector<8x784xbf16>
    %46 = math.exp %45 : vector<8x784xbf16>
    %47 = arith.extf %46 : vector<8x784xbf16> to vector<8x784xf32>
    %cst_32 = arith.constant 1.000000e+00 : f32
    %48 = vector.broadcast %cst_32 : f32 to vector<8x784xf32>
    %49 = arith.addf %48, %47 : vector<8x784xf32>
    %50 = tpu.reciprocal %49 {approx = true} : vector<8x784xf32> -> vector<8x784xf32>
    %c0_33 = arith.constant 0 : index
    %c0_34 = arith.constant 0 : index
    %51 = vector.load %arg12[%c0_33, %c0_34] : memref<8x784xf32, #tpu.memory_space<vmem>>, vector<8x784xf32>
    tpu.vector_store %arg12[%c0_33, %c0_34], %50 {strides = array<i32>} : memref<8x784xf32, #tpu.memory_space<vmem>>, vector<8x784xf32>,
    return
  }
  func.func @transform_0(%arg0: i32) -> (i32, i32) {
    %c0_i32 = arith.constant 0 : i32
    %c0_i32_0 = arith.constant 0 : i32
    return %arg0, %c0_i32 : i32, i32
  }
  func.func @transform_1(%arg0: i32) -> (i32, i32) {
    %c0_i32 = arith.constant 0 : i32
    %c0_i32_0 = arith.constant 0 : i32
    %c0_i32_1 = arith.constant 0 : i32
    return %c0_i32, %c0_i32_0 : i32, i32
  }
  func.func @transform_2(%arg0: i32) -> (i32, i32) {
    %c0_i32 = arith.constant 0 : i32
    %c0_i32_0 = arith.constant 0 : i32
    %c0_i32_1 = arith.constant 0 : i32
    return %c0_i32, %c0_i32_0 : i32, i32
  }
  func.func @transform_3(%arg0: i32) -> (i32, i32) {
    %c0_i32 = arith.constant 0 : i32
    %c0_i32_0 = arith.constant 0 : i32
    %c0_i32_1 = arith.constant 0 : i32
    return %c0_i32, %c0_i32_0 : i32, i32
  }
  func.func @transform_4(%arg0: i32) -> (i32, i32) {
    %c0_i32 = arith.constant 0 : i32
    %c0_i32_0 = arith.constant 0 : i32
    %c0_i32_1 = arith.constant 0 : i32
    return %c0_i32, %c0_i32_0 : i32, i32
  }
  func.func @transform_5(%arg0: i32) -> (i32, i32) {
    %c0_i32 = arith.constant 0 : i32
    %c0_i32_0 = arith.constant 0 : i32
    %c0_i32_1 = arith.constant 0 : i32
    return %c0_i32, %c0_i32_0 : i32, i32
  }
  func.func @transform_6(%arg0: i32) -> (i32, i32) {
    %c0_i32 = arith.constant 0 : i32
    %c0_i32_0 = arith.constant 0 : i32
    %c0_i32_1 = arith.constant 0 : i32
    return %c0_i32, %c0_i32_0 : i32, i32
  }
  func.func @transform_7(%arg0: i32) -> (i32, i32) {
    %c0_i32 = arith.constant 0 : i32
    %c0_i32_0 = arith.constant 0 : i32
    %c0_i32_1 = arith.constant 0 : i32
    return %c0_i32, %c0_i32_0 : i32, i32
  }
  func.func @transform_8(%arg0: i32) -> (i32, i32) {
    %c0_i32 = arith.constant 0 : i32
    %c0_i32_0 = arith.constant 0 : i32
    %c0_i32_1 = arith.constant 0 : i32
    return %c0_i32, %c0_i32_0 : i32, i32
  }
  func.func @transform_9(%arg0: i32) -> (i32, i32) {
    %c0_i32 = arith.constant 0 : i32
    %c0_i32_0 = arith.constant 0 : i32
    %c0_i32_1 = arith.constant 0 : i32
    return %c0_i32, %c0_i32_0 : i32, i32
  }
  func.func @transform_10(%arg0: i32) -> (i32, i32) {
    %c0_i32 = arith.constant 0 : i32
    %c0_i32_0 = arith.constant 0 : i32
    %c0_i32_1 = arith.constant 0 : i32
    return %c0_i32, %c0_i32_0 : i32, i32
  }
  func.func @transform_11(%arg0: i32) -> (i32, i32) {
    %c0_i32 = arith.constant 0 : i32
    %c0_i32_0 = arith.constant 0 : i32
    return %arg0, %c0_i32 : i32, i32
  }
}

</mosaic_0001>

<llo_original>
// kernel: tpu_custom_call.1
$region0: #{tpu_custom_call.1}
  #allocation0 [shape = 'u32[]', space=smem, size = 0x4, offset = 0x4, fixed_abs, tag = 'smem constant byte address 0x4 - core index']
  #allocation1 [shape = 'u32[144,128]{1,0:T(1,128)}', space=vmem, size = 0x12000, scoped, tag = 'internal scratch']
  %s0 = inlined_call_operand.vmem [shape: f32[8,784], index: 0, kind: input, shape index: {}]
  %s1 = inlined_call_operand.vmem [shape: bf16[784,128], index: 1, kind: input, shape index: {}]
  %s2 = inlined_call_operand.vmem [shape: f32[1,128], index: 2, kind: input, shape index: {}]
  %s3 = inlined_call_operand.vmem [shape: bf16[128,64], index: 3, kind: input, shape index: {}]
  %s4 = inlined_call_operand.vmem [shape: f32[1,64], index: 4, kind: input, shape index: {}]
  %s5 = inlined_call_operand.vmem [shape: bf16[64,64], index: 5, kind: input, shape index: {}]
  %s6 = inlined_call_operand.vmem [shape: f32[1,64], index: 6, kind: input, shape index: {}]
  %s7 = inlined_call_operand.vmem [shape: bf16[64,128], index: 7, kind: input, shape index: {}]
  %s8 = inlined_call_operand.vmem [shape: f32[1,128], index: 8, kind: input, shape index: {}]
  %s9 = inlined_call_operand.vmem [shape: bf16[128,784], index: 9, kind: input, shape index: {}]
  %s10 = inlined_call_operand.vmem [shape: f32[1,784], index: 10, kind: input, shape index: {}]
  %s11 = inlined_call_operand.hbm [shape: f32[8,784], index: 11, kind: output, shape index: {}]
  %s12 = sld [smem:[#allocation0]]
  $region54: #{tpu_custom_call.1} parent=0
    _
  %s14 = ssub.s32 1, %s12
  %s15 = scalar_select 0, %s14, %s12
  $region1: #{tpu_custom_call.1} parent=0
    #allocation2 [shape = 'u8[28672]{0}', space=vmem, size = 0x7000, scoped, tag = 'output window, operand 0, single buffered']
    #allocation3 [shape = 's32[1]{0}', space=sflag, size = 0x4, scoped, tag = 'scoped memory for tpu_custom_call.1']
    %16 = vsyncpa [#allocation3], 0
    // Predicated region
    $region2: #{tpu_custom_call.1} parent=1 // pred_check
      _
    $region3: #{tpu_custom_call.1} parent=1 // pred_check_branch
      %18 = sbr.rel (0) target = $region5
    $region4: #{tpu_custom_call.1} parent=1 // pred_region
      _
    $region5: #{tpu_custom_call.1} parent=1 // pred_fallthru
      _
    // Predicated region
    $region6: #{tpu_custom_call.1} parent=1 // pred_check
      _
    $region7: #{tpu_custom_call.1} parent=1 // pred_check_branch
      %20 = sbr.rel (0) target = $region9
    $region8: #{tpu_custom_call.1} parent=1 // pred_region
      _
    $region9: #{tpu_custom_call.1} parent=1 // pred_fallthru
      _
    // Predicated region
    $region10: #{tpu_custom_call.1} parent=1 // pred_check
      _
    $region11: #{tpu_custom_call.1} parent=1 // pred_check_branch
      %22 = sbr.rel (0) target = $region13
    $region12: #{tpu_custom_call.1} parent=1 // pred_region
      _
    $region13: #{tpu_custom_call.1} parent=1 // pred_fallthru
      _
    // Predicated region
    $region14: #{tpu_custom_call.1} parent=1 // pred_check
      _
    $region15: #{tpu_custom_call.1} parent=1 // pred_check_branch
      %24 = sbr.rel (0) target = $region17
    $region16: #{tpu_custom_call.1} parent=1 // pred_region
      _
    $region17: #{tpu_custom_call.1} parent=1 // pred_fallthru
      _
    // Predicated region
    $region18: #{tpu_custom_call.1} parent=1 // pred_check
      _
    $region19: #{tpu_custom_call.1} parent=1 // pred_check_branch
      %26 = sbr.rel (0) target = $region21
    $region20: #{tpu_custom_call.1} parent=1 // pred_region
      _
    $region21: #{tpu_custom_call.1} parent=1 // pred_fallthru
      _
    // Predicated region
    $region22: #{tpu_custom_call.1} parent=1 // pred_check
      _
    $region23: #{tpu_custom_call.1} parent=1 // pred_check_branch
      %28 = sbr.rel (0) target = $region25
    $region24: #{tpu_custom_call.1} parent=1 // pred_region
      _
    $region25: #{tpu_custom_call.1} parent=1 // pred_fallthru
      _
    // Predicated region
    $region26: #{tpu_custom_call.1} parent=1 // pred_check
      _
    $region27: #{tpu_custom_call.1} parent=1 // pred_check_branch
      %30 = sbr.rel (0) target = $region29
    $region28: #{tpu_custom_call.1} parent=1 // pred_region
      _
    $region29: #{tpu_custom_call.1} parent=1 // pred_fallthru
      _
    // Predicated region
    $region30: #{tpu_custom_call.1} parent=1 // pred_check
      _
    $region31: #{tpu_custom_call.1} parent=1 // pred_check_branch
      %32 = sbr.rel (0) target = $region33
    $region32: #{tpu_custom_call.1} parent=1 // pred_region
      _
    $region33: #{tpu_custom_call.1} parent=1 // pred_fallthru
      _
    // Predicated region
    $region34: #{tpu_custom_call.1} parent=1 // pred_check
      _
    $region35: #{tpu_custom_call.1} parent=1 // pred_check_branch
      %34 = sbr.rel (0) target = $region37
    $region36: #{tpu_custom_call.1} parent=1 // pred_region
      _
    $region37: #{tpu_custom_call.1} parent=1 // pred_fallthru
      _
    // Predicated region
    $region38: #{tpu_custom_call.1} parent=1 // pred_check
      _
    $region39: #{tpu_custom_call.1} parent=1 // pred_check_branch
      %36 = sbr.rel (0) target = $region41
    $region40: #{tpu_custom_call.1} parent=1 // pred_region
      _
    $region41: #{tpu_custom_call.1} parent=1 // pred_fallthru
      _
    // Predicated region
    $region42: #{tpu_custom_call.1} parent=1 // pred_check
      _
    $region43: #{tpu_custom_call.1} parent=1 // pred_check_branch
      %38 = sbr.rel (0) target = $region45
    $region44: #{tpu_custom_call.1} parent=1 // pred_region
      _
    $region45: #{tpu_custom_call.1} parent=1 // pred_fallthru
      _
    %v40 = vld [vmem:[%s0] sm:$0xff]
    %v41 = vld [vmem:[%s0 + $0x8] sm:$0xff]
    %v42 = vld [vmem:[%s0 + $0x10] sm:$0xff]
    %v43 = vld [vmem:[%s0 + $0x18] sm:$0xff]
    %v44 = vld [vmem:[%s0 + $0x20] sm:$0xff]
    %v45 = vld [vmem:[%s0 + $0x28] sm:$0xff]
    %v46 = vld [vmem:[%s0 + $0x30] sm:$0xff]
    %v47 = vpack.c.bf16 %v40, %v40
    %v48 = vpack.c.bf16 %v41, %v41
    %v49 = vpack.c.bf16 %v42, %v42
    %v50 = vpack.c.bf16 %v43, %v43
    %v51 = vpack.c.bf16 %v44, %v44
    %v52 = vpack.c.bf16 %v45, %v45
    %v53 = vpack.c.bf16 %v46, %v46
    %v54 = vld [vmem:[%s1] sm:$0xf]
    %v55 = vld [vmem:[%s1 + $0x4] sm:$0xf]
    %v56 = vld [vmem:[%s1 + $0x8] sm:$0xf]
    %v57 = vld [vmem:[%s1 + $0xc] sm:$0xf]
    %v58 = vld [vmem:[%s1 + $0x10] sm:$0xf]
    %v59 = vld [vmem:[%s1 + $0x14] sm:$0xf]
    %v60 = vld [vmem:[%s1 + $0x18] sm:$0xf]
    %v61 = vld [vmem:[%s1 + $0x1c] sm:$0xf]
    %v62 = vld [vmem:[%s1 + $0x20] sm:$0xf]
    %v63 = vld [vmem:[%s1 + $0x24] sm:$0xf]
    %v64 = vld [vmem:[%s1 + $0x28] sm:$0xf]
    %v65 = vld [vmem:[%s1 + $0x2c] sm:$0xf]
    %v66 = vld [vmem:[%s1 + $0x30] sm:$0xf]
    %v67 = vld [vmem:[%s1 + $0x34] sm:$0xf]
    %v68 = vld [vmem:[%s1 + $0x38] sm:$0xf]
    %v69 = vld [vmem:[%s1 + $0x3c] sm:$0xf]
    %v70 = vld [vmem:[%s1 + $0x40] sm:$0xf]
    %v71 = vld [vmem:[%s1 + $0x44] sm:$0xf]
    %v72 = vld [vmem:[%s1 + $0x48] sm:$0xf]
    %v73 = vld [vmem:[%s1 + $0x4c] sm:$0xf]
    %v74 = vld [vmem:[%s1 + $0x50] sm:$0xf]
    %v75 = vld [vmem:[%s1 + $0x54] sm:$0xf]
    %v76 = vld [vmem:[%s1 + $0x58] sm:$0xf]
    %v77 = vld [vmem:[%s1 + $0x5c] sm:$0xf]
    %v78 = vld [vmem:[%s1 + $0x60] sm:$0xf]
    %v79 = vld [vmem:[%s1 + $0x64] sm:$0xf]
    %v80 = vld [vmem:[%s1 + $0x68] sm:$0xf]
    %v81 = vld [vmem:[%s1 + $0x6c] sm:$0xf]
    %v82 = vld [vmem:[%s1 + $0x70] sm:$0xf]
    %v83 = vld [vmem:[%s1 + $0x74] sm:$0xf]
    %v84 = vld [vmem:[%s1 + $0x78] sm:$0xf]
    %v85 = vld [vmem:[%s1 + $0x7c] sm:$0xf]
    %v86 = vld [vmem:[%s1 + $0x80] sm:$0xf]
    %v87 = vld [vmem:[%s1 + $0x84] sm:$0xf]
    %v88 = vld [vmem:[%s1 + $0x88] sm:$0xf]
    %v89 = vld [vmem:[%s1 + $0x8c] sm:$0xf]
    %v90 = vld [vmem:[%s1 + $0x90] sm:$0xf]
    %v91 = vld [vmem:[%s1 + $0x94] sm:$0xf]
    %v92 = vld [vmem:[%s1 + $0x98] sm:$0xf]
    %v93 = vld [vmem:[%s1 + $0x9c] sm:$0xf]
    %v94 = vld [vmem:[%s1 + $0xa0] sm:$0xf]
    %v95 = vld [vmem:[%s1 + $0xa4] sm:$0xf]
    %v96 = vld [vmem:[%s1 + $0xa8] sm:$0xf]
    %v97 = vld [vmem:[%s1 + $0xac] sm:$0xf]
    %v98 = vld [vmem:[%s1 + $0xb0] sm:$0xf]
    %v99 = vld [vmem:[%s1 + $0xb4] sm:$0xf]
    %v100 = vld [vmem:[%s1 + $0xb8] sm:$0xf]
    %v101 = vld [vmem:[%s1 + $0xbc] sm:$0xf]
    %v102 = vld [vmem:[%s1 + $0xc0] sm:$0xf]
    %v103 = vld [vmem:[%s1 + $0xc4] sm:$0xf]
    %v104 = vld [vmem:[%s1 + $0xc8] sm:$0xf]
    %v105 = vld [vmem:[%s1 + $0xcc] sm:$0xf]
    %v106 = vld [vmem:[%s1 + $0xd0] sm:$0xf]
    %v107 = vld [vmem:[%s1 + $0xd4] sm:$0xf]
    %v108 = vld [vmem:[%s1 + $0xd8] sm:$0xf]
    %v109 = vld [vmem:[%s1 + $0xdc] sm:$0xf]
    %v110 = vld [vmem:[%s1 + $0xe0] sm:$0xf]
    %v111 = vld [vmem:[%s1 + $0xe4] sm:$0xf]
    %v112 = vld [vmem:[%s1 + $0xe8] sm:$0xf]
    %v113 = vld [vmem:[%s1 + $0xec] sm:$0xf]
    %v114 = vld [vmem:[%s1 + $0xf0] sm:$0xf]
    %v115 = vld [vmem:[%s1 + $0xf4] sm:$0xf]
    %v116 = vld [vmem:[%s1 + $0xf8] sm:$0xf]
    %v117 = vld [vmem:[%s1 + $0xfc] sm:$0xf]
    %v118 = vld [vmem:[%s1 + $0x100] sm:$0xf]
    %v119 = vld [vmem:[%s1 + $0x104] sm:$0xf]
    %v120 = vld [vmem:[%s1 + $0x108] sm:$0xf]
    %v121 = vld [vmem:[%s1 + $0x10c] sm:$0xf]
    %v122 = vld [vmem:[%s1 + $0x110] sm:$0xf]
    %v123 = vld [vmem:[%s1 + $0x114] sm:$0xf]
    %v124 = vld [vmem:[%s1 + $0x118] sm:$0xf]
    %v125 = vld [vmem:[%s1 + $0x11c] sm:$0xf]
    %v126 = vld [vmem:[%s1 + $0x120] sm:$0xf]
    %v127 = vld [vmem:[%s1 + $0x124] sm:$0xf]
    %v128 = vld [vmem:[%s1 + $0x128] sm:$0xf]
    %v129 = vld [vmem:[%s1 + $0x12c] sm:$0xf]
    %v130 = vld [vmem:[%s1 + $0x130] sm:$0xf]
    %v131 = vld [vmem:[%s1 + $0x134] sm:$0xf]
    %v132 = vld [vmem:[%s1 + $0x138] sm:$0xf]
    %v133 = vld [vmem:[%s1 + $0x13c] sm:$0xf]
    %v134 = vld [vmem:[%s1 + $0x140] sm:$0xf]
    %v135 = vld [vmem:[%s1 + $0x144] sm:$0xf]
    %v136 = vld [vmem:[%s1 + $0x148] sm:$0xf]
    %v137 = vld [vmem:[%s1 + $0x14c] sm:$0xf]
    %v138 = vld [vmem:[%s1 + $0x150] sm:$0xf]
    %v139 = vld [vmem:[%s1 + $0x154] sm:$0xf]
    %v140 = vld [vmem:[%s1 + $0x158] sm:$0xf]
    %v141 = vld [vmem:[%s1 + $0x15c] sm:$0xf]
    %v142 = vld [vmem:[%s1 + $0x160] sm:$0xf]
    %v143 = vld [vmem:[%s1 + $0x164] sm:$0xf]
    %v144 = vld [vmem:[%s1 + $0x168] sm:$0xf]
    %v145 = vld [vmem:[%s1 + $0x16c] sm:$0xf]
    %v146 = vld [vmem:[%s1 + $0x170] sm:$0xf]
    %v147 = vld [vmem:[%s1 + $0x174] sm:$0xf]
    %v148 = vld [vmem:[%s1 + $0x178] sm:$0xf]
    %v149 = vld [vmem:[%s1 + $0x17c] sm:$0xf]
    %v150 = vld [vmem:[%s1 + $0x180] sm:$0xf]
    %v151 = vld [vmem:[%s1 + $0x184] sm:$0xf]
    %v152 = vld [vmem:[%s2] sm:$0x1]
    %v154 = vlaneseq
    %v155 = vshrl.u32 %v154, 7
    %v156 = vsub.s32 0, %v155
    %v157 = vrot.slane %v152, %v156
    %v257 = vunpack.c.l.b16 %v54
    %v258 = vunpack.c.l.b16 %v55
    %v259 = vunpack.c.l.b16 %v56
    %v260 = vunpack.c.l.b16 %v57
    %v261 = vunpack.c.l.b16 %v58
    %v262 = vunpack.c.l.b16 %v59
    %v263 = vunpack.c.l.b16 %v60
    %v264 = vunpack.c.l.b16 %v61
    %v265 = vunpack.c.l.b16 %v62
    %v266 = vunpack.c.l.b16 %v63
    %v267 = vunpack.c.l.b16 %v64
    %v268 = vunpack.c.l.b16 %v65
    %v269 = vunpack.c.l.b16 %v66
    %v270 = vunpack.c.l.b16 %v67
    %v271 = vunpack.c.l.b16 %v68
    %v272 = vunpack.c.l.b16 %v69
    %v273 = vunpack.c.l.b16 %v70
    %v274 = vunpack.c.l.b16 %v71
    %v275 = vunpack.c.l.b16 %v72
    %v276 = vunpack.c.l.b16 %v73
    %v277 = vunpack.c.l.b16 %v74
    %v278 = vunpack.c.l.b16 %v75
    %v279 = vunpack.c.l.b16 %v76
    %v280 = vunpack.c.l.b16 %v77
    %v281 = vunpack.c.l.b16 %v78
    %v282 = vunpack.c.l.b16 %v79
    %v283 = vunpack.c.l.b16 %v80
    %v284 = vunpack.c.l.b16 %v81
    %v285 = vunpack.c.l.b16 %v82
    %v286 = vunpack.c.l.b16 %v83
    %v287 = vunpack.c.l.b16 %v84
    %v288 = vunpack.c.l.b16 %v85
    %v289 = vunpack.c.l.b16 %v86
    %v290 = vunpack.c.l.b16 %v87
    %v291 = vunpack.c.l.b16 %v88
    %v292 = vunpack.c.l.b16 %v89
    %v293 = vunpack.c.l.b16 %v90
    %v294 = vunpack.c.l.b16 %v91
    %v295 = vunpack.c.l.b16 %v92
    %v296 = vunpack.c.l.b16 %v93
    %v297 = vunpack.c.l.b16 %v94
    %v298 = vunpack.c.l.b16 %v95
    %v299 = vunpack.c.l.b16 %v96
    %v300 = vunpack.c.l.b16 %v97
    %v301 = vunpack.c.l.b16 %v98
    %v302 = vunpack.c.l.b16 %v99
    %v303 = vunpack.c.l.b16 %v100
    %v304 = vunpack.c.l.b16 %v101
    %v305 = vunpack.c.l.b16 %v102
    %v306 = vunpack.c.l.b16 %v103
    %v307 = vunpack.c.l.b16 %v104
    %v308 = vunpack.c.l.b16 %v105
    %v309 = vunpack.c.l.b16 %v106
    %v310 = vunpack.c.l.b16 %v107
    %v311 = vunpack.c.l.b16 %v108
    %v312 = vunpack.c.l.b16 %v109
    %v313 = vunpack.c.l.b16 %v110
    %v314 = vunpack.c.l.b16 %v111
    %v315 = vunpack.c.l.b16 %v112
    %v316 = vunpack.c.l.b16 %v113
    %v317 = vunpack.c.l.b16 %v114
    %v318 = vunpack.c.l.b16 %v115
    %v319 = vunpack.c.l.b16 %v116
    %v320 = vunpack.c.l.b16 %v117
    %v321 = vunpack.c.l.b16 %v118
    %v322 = vunpack.c.l.b16 %v119
    %v323 = vunpack.c.l.b16 %v120
    %v324 = vunpack.c.l.b16 %v121
    %v325 = vunpack.c.l.b16 %v122
    %v326 = vunpack.c.l.b16 %v123
    %v327 = vunpack.c.l.b16 %v124
    %v328 = vunpack.c.l.b16 %v125
    %v329 = vunpack.c.l.b16 %v126
    %v330 = vunpack.c.l.b16 %v127
    %v331 = vunpack.c.l.b16 %v128
    %v332 = vunpack.c.l.b16 %v129
    %v333 = vunpack.c.l.b16 %v130
    %v334 = vunpack.c.l.b16 %v131
    %v335 = vunpack.c.l.b16 %v132
    %v336 = vunpack.c.l.b16 %v133
    %v337 = vunpack.c.l.b16 %v134
    %v338 = vunpack.c.l.b16 %v135
    %v339 = vunpack.c.l.b16 %v136
    %v340 = vunpack.c.l.b16 %v137
    %v341 = vunpack.c.l.b16 %v138
    %v342 = vunpack.c.l.b16 %v139
    %v343 = vunpack.c.l.b16 %v140
    %v344 = vunpack.c.l.b16 %v141
    %v345 = vunpack.c.l.b16 %v142
    %v346 = vunpack.c.l.b16 %v143
    %v347 = vunpack.c.l.b16 %v144
    %v348 = vunpack.c.l.b16 %v145
    %v349 = vunpack.c.l.b16 %v146
    %v350 = vunpack.c.l.b16 %v147
    %v351 = vunpack.c.l.b16 %v148
    %v352 = vunpack.c.l.b16 %v149
    %v353 = vunpack.c.l.b16 %v150
    %v354 = vunpack.c.l.b16 %v151
    %v355 = vpack.c.b16 %v258, %v257
    %v356 = vpack.c.b16 %v260, %v259
    %v357 = vpack.c.b16 %v262, %v261
    %v358 = vpack.c.b16 %v264, %v263
    %v359 = vpack.c.b16 %v266, %v265
    %v360 = vpack.c.b16 %v268, %v267
    %v361 = vpack.c.b16 %v270, %v269
    %v362 = vpack.c.b16 %v272, %v271
    %v363 = vpack.c.b16 %v274, %v273
    %v364 = vpack.c.b16 %v276, %v275
    %v365 = vpack.c.b16 %v278, %v277
    %v366 = vpack.c.b16 %v280, %v279
    %v367 = vpack.c.b16 %v282, %v281
    %v368 = vpack.c.b16 %v284, %v283
    %v369 = vpack.c.b16 %v286, %v285
    %v370 = vpack.c.b16 %v288, %v287
    %v371 = vpack.c.b16 %v290, %v289
    %v372 = vpack.c.b16 %v292, %v291
    %v373 = vpack.c.b16 %v294, %v293
    %v374 = vpack.c.b16 %v296, %v295
    %v375 = vpack.c.b16 %v298, %v297
    %v376 = vpack.c.b16 %v300, %v299
    %v377 = vpack.c.b16 %v302, %v301
    %v378 = vpack.c.b16 %v304, %v303
    %v379 = vpack.c.b16 %v306, %v305
    %v380 = vpack.c.b16 %v308, %v307
    %v381 = vpack.c.b16 %v310, %v309
    %v382 = vpack.c.b16 %v312, %v311
    %v383 = vpack.c.b16 %v314, %v313
    %v384 = vpack.c.b16 %v316, %v315
    %v385 = vpack.c.b16 %v318, %v317
    %v386 = vpack.c.b16 %v320, %v319
    %v387 = vpack.c.b16 %v322, %v321
    %v388 = vpack.c.b16 %v324, %v323
    %v389 = vpack.c.b16 %v326, %v325
    %v390 = vpack.c.b16 %v328, %v327
    %v391 = vpack.c.b16 %v330, %v329
    %v392 = vpack.c.b16 %v332, %v331
    %v393 = vpack.c.b16 %v334, %v333
    %v394 = vpack.c.b16 %v336, %v335
    %v395 = vpack.c.b16 %v338, %v337
    %v396 = vpack.c.b16 %v340, %v339
    %v397 = vpack.c.b16 %v342, %v341
    %v398 = vpack.c.b16 %v344, %v343
    %v399 = vpack.c.b16 %v346, %v345
    %v400 = vpack.c.b16 %v348, %v347
    %v401 = vpack.c.b16 %v350, %v349
    %v402 = vpack.c.b16 %v352, %v351
    %v403 = vpack.c.b16 %v354, %v353
    %vm453 = vcmask 130048
    %v455 = vsel %vm453, %v53, 0
    %457 = vmatprep.subr.bf16.mxu0 0
    %458 = vmatpush1.bf16.msra.mxu0 %v355
    %459 = vmatprep.subr.bf16.mxu0 0
    %460 = vmatpush1.bf16.msra.mxu0 %v356
    %461 = vmatprep.subr.bf16.mxu0 0
    %462 = vmatpush1.bf16.msra.mxu0 %v357
    %463 = vmatprep.subr.bf16.mxu0 0
    %464 = vmatpush1.bf16.msra.mxu0 %v358
    %465 = vmatprep.subr.bf16.mxu0 0
    %466 = vmatpush1.bf16.msra.mxu0 %v359
    %467 = vmatprep.subr.bf16.mxu0 0
    %468 = vmatpush1.bf16.msra.mxu0 %v360
    %469 = vmatprep.subr.bf16.mxu0 0
    %470 = vmatpush1.bf16.msra.mxu0 %v361
    %471 = vmatprep.subr.bf16.mxu0 0
    %472 = vmatpush1.bf16.msra.mxu0 %v362
    %473 = vmatprep.subr.bf16.mxu0 0
    %474 = vmatpush1.bf16.msra.mxu0 %v363
    %475 = vmatprep.subr.bf16.mxu0 0
    %476 = vmatpush1.bf16.msra.mxu0 %v364
    %477 = vmatprep.subr.bf16.mxu0 0
    %478 = vmatpush1.bf16.msra.mxu0 %v365
    %479 = vmatprep.subr.bf16.mxu0 0
    %480 = vmatpush1.bf16.msra.mxu0 %v366
    %481 = vmatprep.subr.bf16.mxu0 0
    %482 = vmatpush1.bf16.msra.mxu0 %v367
    %483 = vmatprep.subr.bf16.mxu0 0
    %484 = vmatpush1.bf16.msra.mxu0 %v368
    %485 = vmatprep.subr.bf16.mxu0 0
    %486 = vmatpush1.bf16.msra.mxu0 %v369
    %487 = vmatprep.subr.bf16.mxu0 0
    %488 = vmatpush1.bf16.msra.mxu0 %v370
    %489 = vmatprep.mubr.bf16.mxu0 %v48
    %490 = vmatmul.mubr.bf16.gmra.mrb[0].mxu0 %v47
    %v491 = vpop.f32.mrb[0].mxu0
    %v492 = vadd.f32 %v157, %v491
    %v493 = vpop.f32.mrb[0].mxu0
    %v494 = vpop.f32.mrb[0].mxu0
    %v495 = vpop.f32.mrb[0].mxu0
    %496 = vdwg.mxu0
    %497 = vmatprep.subr.bf16.mxu0 0
    %498 = vmatpush1.bf16.msra.mxu0 %v371
    %499 = vmatprep.subr.bf16.mxu0 0
    %500 = vmatpush1.bf16.msra.mxu0 %v372
    %501 = vmatprep.subr.bf16.mxu0 0
    %502 = vmatpush1.bf16.msra.mxu0 %v373
    %503 = vmatprep.subr.bf16.mxu0 0
    %504 = vmatpush1.bf16.msra.mxu0 %v374
    %505 = vmatprep.subr.bf16.mxu0 0
    %506 = vmatpush1.bf16.msra.mxu0 %v375
    %507 = vmatprep.subr.bf16.mxu0 0
    %508 = vmatpush1.bf16.msra.mxu0 %v376
    %509 = vmatprep.subr.bf16.mxu0 0
    %510 = vmatpush1.bf16.msra.mxu0 %v377
    %511 = vmatprep.subr.bf16.mxu0 0
    %512 = vmatpush1.bf16.msra.mxu0 %v378
    %513 = vmatprep.subr.bf16.mxu0 0
    %514 = vmatpush1.bf16.msra.mxu0 %v379
    %515 = vmatprep.subr.bf16.mxu0 0
    %516 = vmatpush1.bf16.msra.mxu0 %v380
    %517 = vmatprep.subr.bf16.mxu0 0
    %518 = vmatpush1.bf16.msra.mxu0 %v381
    %519 = vmatprep.subr.bf16.mxu0 0
    %520 = vmatpush1.bf16.msra.mxu0 %v382
    %521 = vmatprep.subr.bf16.mxu0 0
    %522 = vmatpush1.bf16.msra.mxu0 %v383
    %523 = vmatprep.subr.bf16.mxu0 0
    %524 = vmatpush1.bf16.msra.mxu0 %v384
    %525 = vmatprep.subr.bf16.mxu0 0
    %526 = vmatpush1.bf16.msra.mxu0 %v385
    %527 = vmatprep.subr.bf16.mxu0 0
    %528 = vmatpush1.bf16.msra.mxu0 %v386
    %529 = vmatprep.mubr.bf16.mxu0 %v50
    %530 = vmatmul.mubr.bf16.gmra.mrb[0].mxu0 %v49
    %v531 = vpop.f32.mrb[0].mxu0
    %v532 = vadd.f32 %v492, %v531
    %v533 = vpop.f32.mrb[0].mxu0
    %v534 = vpop.f32.mrb[0].mxu0
    %v535 = vpop.f32.mrb[0].mxu0
    %536 = vdwg.mxu0
    %537 = vmatprep.subr.bf16.mxu0 0
    %538 = vmatpush1.bf16.msra.mxu0 %v387
    %539 = vmatprep.subr.bf16.mxu0 0
    %540 = vmatpush1.bf16.msra.mxu0 %v388
    %541 = vmatprep.subr.bf16.mxu0 0
    %542 = vmatpush1.bf16.msra.mxu0 %v389
    %543 = vmatprep.subr.bf16.mxu0 0
    %544 = vmatpush1.bf16.msra.mxu0 %v390
    %545 = vmatprep.subr.bf16.mxu0 0
    %546 = vmatpush1.bf16.msra.mxu0 %v391
    %547 = vmatprep.subr.bf16.mxu0 0
    %548 = vmatpush1.bf16.msra.mxu0 %v392
    %549 = vmatprep.subr.bf16.mxu0 0
    %550 = vmatpush1.bf16.msra.mxu0 %v393
    %551 = vmatprep.subr.bf16.mxu0 0
    %552 = vmatpush1.bf16.msra.mxu0 %v394
    %553 = vmatprep.subr.bf16.mxu0 0
    %554 = vmatpush1.bf16.msra.mxu0 %v395
    %555 = vmatprep.subr.bf16.mxu0 0
    %556 = vmatpush1.bf16.msra.mxu0 %v396
    %557 = vmatprep.subr.bf16.mxu0 0
    %558 = vmatpush1.bf16.msra.mxu0 %v397
    %559 = vmatprep.subr.bf16.mxu0 0
    %560 = vmatpush1.bf16.msra.mxu0 %v398
    %561 = vmatprep.subr.bf16.mxu0 0
    %562 = vmatpush1.bf16.msra.mxu0 %v399
    %563 = vmatprep.subr.bf16.mxu0 0
    %564 = vmatpush1.bf16.msra.mxu0 %v400
    %565 = vmatprep.subr.bf16.mxu0 0
    %566 = vmatpush1.bf16.msra.mxu0 %v401
    %567 = vmatprep.subr.bf16.mxu0 0
    %568 = vmatpush1.bf16.msra.mxu0 %v402
    %569 = vmatprep.mubr.bf16.mxu0 %v52
    %570 = vmatmul.mubr.bf16.gmra.mrb[0].mxu0 %v51
    %v571 = vpop.f32.mrb[0].mxu0
    %v572 = vadd.f32 %v532, %v571
    %v573 = vpop.f32.mrb[0].mxu0
    %v574 = vpop.f32.mrb[0].mxu0
    %v575 = vpop.f32.mrb[0].mxu0
    %576 = vdwg.mxu0
    %577 = vmatprep.subr.bf16.mxu0 0
    %578 = vmatpush1.bf16.msra.mxu0 %v403
    %579 = vmatprep.subr.bf16.mxu0 0
    %580 = vmatpush1.bf16.msra.mxu0 0
    %581 = vmatprep.subr.bf16.mxu0 0
    %582 = vmatpush1.bf16.msra.mxu0 0
    %583 = vmatprep.subr.bf16.mxu0 0
    %584 = vmatpush1.bf16.msra.mxu0 0
    %585 = vmatprep.subr.bf16.mxu0 0
    %586 = vmatpush1.bf16.msra.mxu0 0
    %587 = vmatprep.subr.bf16.mxu0 0
    %588 = vmatpush1.bf16.msra.mxu0 0
    %589 = vmatprep.subr.bf16.mxu0 0
    %590 = vmatpush1.bf16.msra.mxu0 0
    %591 = vmatprep.subr.bf16.mxu0 0
    %592 = vmatpush1.bf16.msra.mxu0 0
    %593 = vmatprep.subr.bf16.mxu0 0
    %594 = vmatpush1.bf16.msra.mxu0 0
    %595 = vmatprep.subr.bf16.mxu0 0
    %596 = vmatpush1.bf16.msra.mxu0 0
    %597 = vmatprep.subr.bf16.mxu0 0
    %598 = vmatpush1.bf16.msra.mxu0 0
    %599 = vmatprep.subr.bf16.mxu0 0
    %600 = vmatpush1.bf16.msra.mxu0 0
    %601 = vmatprep.subr.bf16.mxu0 0
    %602 = vmatpush1.bf16.msra.mxu0 0
    %603 = vmatprep.subr.bf16.mxu0 0
    %604 = vmatpush1.bf16.msra.mxu0 0
    %605 = vmatprep.subr.bf16.mxu0 0
    %606 = vmatpush1.bf16.msra.mxu0 0
    %607 = vmatprep.subr.bf16.mxu0 0
    %608 = vmatpush1.bf16.msra.mxu0 0
    %609 = vmatprep.mubr.bf16.mxu0 0
    %610 = vmatmul.mubr.bf16.gmra.mrb[0].mxu0 %v455
    %v611 = vpop.f32.mrb[0].mxu0
    %v612 = vadd.f32 %v572, %v611
    %v613 = vpop.f32.mrb[0].mxu0
    %v614 = vpop.f32.mrb[0].mxu0
    %v615 = vpop.f32.mrb[0].mxu0
    %616 = vdwg.mxu0
    %v617 = vmax.f32 %v612, 0.0
    %v618 = vpack.c.bf16 %v617, %v617
    %v619 = vld [vmem:[%s3] sm:$0xf]
    %v620 = vld [vmem:[%s3 + $0x4] sm:$0xf]
    %v621 = vld [vmem:[%s3 + $0x8] sm:$0xf]
    %v622 = vld [vmem:[%s3 + $0xc] sm:$0xf]
    %v623 = vld [vmem:[%s3 + $0x10] sm:$0xf]
    %v624 = vld [vmem:[%s3 + $0x14] sm:$0xf]
    %v625 = vld [vmem:[%s3 + $0x18] sm:$0xf]
    %v626 = vld [vmem:[%s3 + $0x1c] sm:$0xf]
    %v627 = vld [vmem:[%s3 + $0x20] sm:$0xf]
    %v628 = vld [vmem:[%s3 + $0x24] sm:$0xf]
    %v629 = vld [vmem:[%s3 + $0x28] sm:$0xf]
    %v630 = vld [vmem:[%s3 + $0x2c] sm:$0xf]
    %v631 = vld [vmem:[%s3 + $0x30] sm:$0xf]
    %v632 = vld [vmem:[%s3 + $0x34] sm:$0xf]
    %v633 = vld [vmem:[%s3 + $0x38] sm:$0xf]
    %v634 = vld [vmem:[%s3 + $0x3c] sm:$0xf]
    %v635 = vld [vmem:[%s4] sm:$0x1]
    %v637 = vlaneseq
    %v638 = vshrl.u32 %v637, 7
    %v639 = vsub.s32 0, %v638
    %v640 = vrot.slane %v635, %v639
    %v658 = vunpack.c.l.b16 %v619
    %v659 = vunpack.c.l.b16 %v620
    %v660 = vunpack.c.l.b16 %v621
    %v661 = vunpack.c.l.b16 %v622
    %v662 = vunpack.c.l.b16 %v623
    %v663 = vunpack.c.l.b16 %v624
    %v664 = vunpack.c.l.b16 %v625
    %v665 = vunpack.c.l.b16 %v626
    %v666 = vunpack.c.l.b16 %v627
    %v667 = vunpack.c.l.b16 %v628
    %v668 = vunpack.c.l.b16 %v629
    %v669 = vunpack.c.l.b16 %v630
    %v670 = vunpack.c.l.b16 %v631
    %v671 = vunpack.c.l.b16 %v632
    %v672 = vunpack.c.l.b16 %v633
    %v673 = vunpack.c.l.b16 %v634
    %v674 = vpack.c.b16 %v659, %v658
    %v675 = vpack.c.b16 %v661, %v660
    %v676 = vpack.c.b16 %v663, %v662
    %v677 = vpack.c.b16 %v665, %v664
    %v678 = vpack.c.b16 %v667, %v666
    %v679 = vpack.c.b16 %v669, %v668
    %v680 = vpack.c.b16 %v671, %v670
    %v681 = vpack.c.b16 %v673, %v672
    %690 = vmatprep.subr.bf16.mxu0 0
    %691 = vmatpush1.bf16.msra.mxu0 %v674
    %692 = vmatprep.subr.bf16.mxu0 0
    %693 = vmatpush1.bf16.msra.mxu0 %v675
    %694 = vmatprep.subr.bf16.mxu0 0
    %695 = vmatpush1.bf16.msra.mxu0 %v676
    %696 = vmatprep.subr.bf16.mxu0 0
    %697 = vmatpush1.bf16.msra.mxu0 %v677
    %698 = vmatprep.subr.bf16.mxu0 0
    %699 = vmatpush1.bf16.msra.mxu0 %v678
    %700 = vmatprep.subr.bf16.mxu0 0
    %701 = vmatpush1.bf16.msra.mxu0 %v679
    %702 = vmatprep.subr.bf16.mxu0 0
    %703 = vmatpush1.bf16.msra.mxu0 %v680
    %704 = vmatprep.subr.bf16.mxu0 0
    %705 = vmatpush1.bf16.msra.mxu0 %v681
    %706 = vmatprep.subr.bf16.mxu0 0
    %707 = vmatpush1.bf16.msra.mxu0 0
    %708 = vmatprep.subr.bf16.mxu0 0
    %709 = vmatpush1.bf16.msra.mxu0 0
    %710 = vmatprep.subr.bf16.mxu0 0
    %711 = vmatpush1.bf16.msra.mxu0 0
    %712 = vmatprep.subr.bf16.mxu0 0
    %713 = vmatpush1.bf16.msra.mxu0 0
    %714 = vmatprep.subr.bf16.mxu0 0
    %715 = vmatpush1.bf16.msra.mxu0 0
    %716 = vmatprep.subr.bf16.mxu0 0
    %717 = vmatpush1.bf16.msra.mxu0 0
    %718 = vmatprep.subr.bf16.mxu0 0
    %719 = vmatpush1.bf16.msra.mxu0 0
    %720 = vmatprep.subr.bf16.mxu0 0
    %721 = vmatpush1.bf16.msra.mxu0 0
    %722 = vmatprep.mubr.bf16.mxu0 0
    %723 = vmatmul.mubr.bf16.gmra.mrb[0].mxu0 %v618
    %v724 = vpop.f32.mrb[0].mxu0
    %v725 = vadd.f32 %v640, %v724
    %v726 = vpop.f32.mrb[0].mxu0
    %v727 = vpop.f32.mrb[0].mxu0
    %v728 = vpop.f32.mrb[0].mxu0
    %729 = vdwg.mxu0
    %v730 = vmax.f32 %v725, 0.0
    %v731 = vpack.c.bf16 %v730, %v730
    %v732 = vld [vmem:[%s5] sm:$0xf]
    %v733 = vld [vmem:[%s5 + $0x4] sm:$0xf]
    %v734 = vld [vmem:[%s5 + $0x8] sm:$0xf]
    %v735 = vld [vmem:[%s5 + $0xc] sm:$0xf]
    %v736 = vld [vmem:[%s5 + $0x10] sm:$0xf]
    %v737 = vld [vmem:[%s5 + $0x14] sm:$0xf]
    %v738 = vld [vmem:[%s5 + $0x18] sm:$0xf]
    %v739 = vld [vmem:[%s5 + $0x1c] sm:$0xf]
    %v740 = vld [vmem:[%s6] sm:$0x1]
    %v742 = vlaneseq
    %v743 = vshrl.u32 %v742, 7
    %v744 = vsub.s32 0, %v743
    %v745 = vrot.slane %v740, %v744
    %v755 = vunpack.c.l.b16 %v732
    %v756 = vunpack.c.l.b16 %v733
    %v757 = vunpack.c.l.b16 %v734
    %v758 = vunpack.c.l.b16 %v735
    %v759 = vunpack.c.l.b16 %v736
    %v760 = vunpack.c.l.b16 %v737
    %v761 = vunpack.c.l.b16 %v738
    %v762 = vunpack.c.l.b16 %v739
    %v763 = vpack.c.b16 %v756, %v755
    %v764 = vpack.c.b16 %v758, %v757
    %v765 = vpack.c.b16 %v760, %v759
    %v766 = vpack.c.b16 %v762, %v761
    %vm771 = vcmask 523264
    %v773 = vsel %vm771, %v731, 0
    %775 = vmatprep.subr.bf16.mxu0 0
    %776 = vmatpush1.bf16.msra.mxu0 %v763
    %777 = vmatprep.subr.bf16.mxu0 0
    %778 = vmatpush1.bf16.msra.mxu0 %v764
    %779 = vmatprep.subr.bf16.mxu0 0
    %780 = vmatpush1.bf16.msra.mxu0 %v765
    %781 = vmatprep.subr.bf16.mxu0 0
    %782 = vmatpush1.bf16.msra.mxu0 %v766
    %783 = vmatprep.subr.bf16.mxu0 0
    %784 = vmatpush1.bf16.msra.mxu0 0
    %785 = vmatprep.subr.bf16.mxu0 0
    %786 = vmatpush1.bf16.msra.mxu0 0
    %787 = vmatprep.subr.bf16.mxu0 0
    %788 = vmatpush1.bf16.msra.mxu0 0
    %789 = vmatprep.subr.bf16.mxu0 0
    %790 = vmatpush1.bf16.msra.mxu0 0
    %791 = vmatprep.subr.bf16.mxu0 0
    %792 = vmatpush1.bf16.msra.mxu0 0
    %793 = vmatprep.subr.bf16.mxu0 0
    %794 = vmatpush1.bf16.msra.mxu0 0
    %795 = vmatprep.subr.bf16.mxu0 0
    %796 = vmatpush1.bf16.msra.mxu0 0
    %797 = vmatprep.subr.bf16.mxu0 0
    %798 = vmatpush1.bf16.msra.mxu0 0
    %799 = vmatprep.subr.bf16.mxu0 0
    %800 = vmatpush1.bf16.msra.mxu0 0
    %801 = vmatprep.subr.bf16.mxu0 0
    %802 = vmatpush1.bf16.msra.mxu0 0
    %803 = vmatprep.subr.bf16.mxu0 0
    %804 = vmatpush1.bf16.msra.mxu0 0
    %805 = vmatprep.subr.bf16.mxu0 0
    %806 = vmatpush1.bf16.msra.mxu0 0
    %807 = vmatprep.mubr.bf16.mxu0 0
    %808 = vmatmul.mubr.bf16.gmra.mrb[0].mxu0 %v773
    %v809 = vpop.f32.mrb[0].mxu0
    %v810 = vadd.f32 %v745, %v809
    %v811 = vpop.f32.mrb[0].mxu0
    %v812 = vpop.f32.mrb[0].mxu0
    %v813 = vpop.f32.mrb[0].mxu0
    %814 = vdwg.mxu0
    %v815 = vmax.f32 %v810, 0.0
    %v816 = vpack.c.bf16 %v815, %v815
    %v817 = vld [vmem:[%s7] sm:$0xf]
    %v818 = vld [vmem:[%s7 + $0x4] sm:$0xf]
    %v819 = vld [vmem:[%s7 + $0x8] sm:$0xf]
    %v820 = vld [vmem:[%s7 + $0xc] sm:$0xf]
    %v821 = vld [vmem:[%s7 + $0x10] sm:$0xf]
    %v822 = vld [vmem:[%s7 + $0x14] sm:$0xf]
    %v823 = vld [vmem:[%s7 + $0x18] sm:$0xf]
    %v824 = vld [vmem:[%s7 + $0x1c] sm:$0xf]
    %v825 = vld [vmem:[%s8] sm:$0x1]
    %v827 = vlaneseq
    %v828 = vshrl.u32 %v827, 7
    %v829 = vsub.s32 0, %v828
    %v830 = vrot.slane %v825, %v829
    %v840 = vunpack.c.l.b16 %v817
    %v841 = vunpack.c.l.b16 %v818
    %v842 = vunpack.c.l.b16 %v819
    %v843 = vunpack.c.l.b16 %v820
    %v844 = vunpack.c.l.b16 %v821
    %v845 = vunpack.c.l.b16 %v822
    %v846 = vunpack.c.l.b16 %v823
    %v847 = vunpack.c.l.b16 %v824
    %v848 = vpack.c.b16 %v841, %v840
    %v849 = vpack.c.b16 %v843, %v842
    %v850 = vpack.c.b16 %v845, %v844
    %v851 = vpack.c.b16 %v847, %v846
    %v857 = vsel %vm771, %v816, 0
    %859 = vmatprep.subr.bf16.mxu0 0
    %860 = vmatpush1.bf16.msra.mxu0 %v848
    %861 = vmatprep.subr.bf16.mxu0 0
    %862 = vmatpush1.bf16.msra.mxu0 %v849
    %863 = vmatprep.subr.bf16.mxu0 0
    %864 = vmatpush1.bf16.msra.mxu0 %v850
    %865 = vmatprep.subr.bf16.mxu0 0
    %866 = vmatpush1.bf16.msra.mxu0 %v851
    %867 = vmatprep.subr.bf16.mxu0 0
    %868 = vmatpush1.bf16.msra.mxu0 0
    %869 = vmatprep.subr.bf16.mxu0 0
    %870 = vmatpush1.bf16.msra.mxu0 0
    %871 = vmatprep.subr.bf16.mxu0 0
    %872 = vmatpush1.bf16.msra.mxu0 0
    %873 = vmatprep.subr.bf16.mxu0 0
    %874 = vmatpush1.bf16.msra.mxu0 0
    %875 = vmatprep.subr.bf16.mxu0 0
    %876 = vmatpush1.bf16.msra.mxu0 0
    %877 = vmatprep.subr.bf16.mxu0 0
    %878 = vmatpush1.bf16.msra.mxu0 0
    %879 = vmatprep.subr.bf16.mxu0 0
    %880 = vmatpush1.bf16.msra.mxu0 0
    %881 = vmatprep.subr.bf16.mxu0 0
    %882 = vmatpush1.bf16.msra.mxu0 0
    %883 = vmatprep.subr.bf16.mxu0 0
    %884 = vmatpush1.bf16.msra.mxu0 0
    %885 = vmatprep.subr.bf16.mxu0 0
    %886 = vmatpush1.bf16.msra.mxu0 0
    %887 = vmatprep.subr.bf16.mxu0 0
    %888 = vmatpush1.bf16.msra.mxu0 0
    %889 = vmatprep.subr.bf16.mxu0 0
    %890 = vmatpush1.bf16.msra.mxu0 0
    %891 = vmatprep.mubr.bf16.mxu0 0
    %892 = vmatmul.mubr.bf16.gmra.mrb[0].mxu0 %v857
    %v893 = vpop.f32.mrb[0].mxu0
    %v894 = vadd.f32 %v830, %v893
    %v895 = vpop.f32.mrb[0].mxu0
    %v896 = vpop.f32.mrb[0].mxu0
    %v897 = vpop.f32.mrb[0].mxu0
    %898 = vdwg.mxu0
    %v899 = vmax.f32 %v894, 0.0
    %v900 = vpack.c.bf16 %v899, %v899
    %v901 = vld [vmem:[%s9] sm:$0xff]
    %v902 = vld [vmem:[%s9 + $0x8] sm:$0xff]
    %v903 = vld [vmem:[%s9 + $0x10] sm:$0xff]
    %v904 = vld [vmem:[%s9 + $0x18] sm:$0xf]
    %v905 = vld [vmem:[%s9 + $0x1c] sm:$0xff]
    %v906 = vld [vmem:[%s9 + $0x24] sm:$0xff]
    %v907 = vld [vmem:[%s9 + $0x2c] sm:$0xff]
    %v908 = vld [vmem:[%s9 + $0x34] sm:$0xf]
    %v909 = vld [vmem:[%s9 + $0x38] sm:$0xff]
    %v910 = vld [vmem:[%s9 + $0x40] sm:$0xff]
    %v911 = vld [vmem:[%s9 + $0x48] sm:$0xff]
    %v912 = vld [vmem:[%s9 + $0x50] sm:$0xf]
    %v913 = vld [vmem:[%s9 + $0x54] sm:$0xff]
    %v914 = vld [vmem:[%s9 + $0x5c] sm:$0xff]
    %v915 = vld [vmem:[%s9 + $0x64] sm:$0xff]
    %v916 = vld [vmem:[%s9 + $0x6c] sm:$0xf]
    %v917 = vld [vmem:[%s9 + $0x70] sm:$0xff]
    %v918 = vld [vmem:[%s9 + $0x78] sm:$0xff]
    %v919 = vld [vmem:[%s9 + $0x80] sm:$0xff]
    %v920 = vld [vmem:[%s9 + $0x88] sm:$0xf]
    %v921 = vld [vmem:[%s9 + $0x8c] sm:$0xff]
    %v922 = vld [vmem:[%s9 + $0x94] sm:$0xff]
    %v923 = vld [vmem:[%s9 + $0x9c] sm:$0xff]
    %v924 = vld [vmem:[%s9 + $0xa4] sm:$0xf]
    %v925 = vld [vmem:[%s9 + $0xa8] sm:$0xff]
    %v926 = vld [vmem:[%s9 + $0xb0] sm:$0xff]
    %v927 = vld [vmem:[%s9 + $0xb8] sm:$0xff]
    %v928 = vld [vmem:[%s9 + $0xc0] sm:$0xf]
    %v929 = vld [vmem:[%s9 + $0xc4] sm:$0xff]
    %v930 = vld [vmem:[%s9 + $0xcc] sm:$0xff]
    %v931 = vld [vmem:[%s9 + $0xd4] sm:$0xff]
    %v932 = vld [vmem:[%s9 + $0xdc] sm:$0xf]
    %v933 = vld [vmem:[%s9 + $0xe0] sm:$0xff]
    %v934 = vld [vmem:[%s9 + $0xe8] sm:$0xff]
    %v935 = vld [vmem:[%s9 + $0xf0] sm:$0xff]
    %v936 = vld [vmem:[%s9 + $0xf8] sm:$0xf]
    %v937 = vld [vmem:[%s9 + $0xfc] sm:$0xff]
    %v938 = vld [vmem:[%s9 + $0x104] sm:$0xff]
    %v939 = vld [vmem:[%s9 + $0x10c] sm:$0xff]
    %v940 = vld [vmem:[%s9 + $0x114] sm:$0xf]
    %v941 = vld [vmem:[%s9 + $0x118] sm:$0xff]
    %v942 = vld [vmem:[%s9 + $0x120] sm:$0xff]
    %v943 = vld [vmem:[%s9 + $0x128] sm:$0xff]
    %v944 = vld [vmem:[%s9 + $0x130] sm:$0xf]
    %v945 = vld [vmem:[%s9 + $0x134] sm:$0xff]
    %v946 = vld [vmem:[%s9 + $0x13c] sm:$0xff]
    %v947 = vld [vmem:[%s9 + $0x144] sm:$0xff]
    %v948 = vld [vmem:[%s9 + $0x14c] sm:$0xf]
    %v949 = vld [vmem:[%s9 + $0x150] sm:$0xff]
    %v950 = vld [vmem:[%s9 + $0x158] sm:$0xff]
    %v951 = vld [vmem:[%s9 + $0x160] sm:$0xff]
    %v952 = vld [vmem:[%s9 + $0x168] sm:$0xf]
    %v953 = vld [vmem:[%s9 + $0x16c] sm:$0xff]
    %v954 = vld [vmem:[%s9 + $0x174] sm:$0xff]
    %v955 = vld [vmem:[%s9 + $0x17c] sm:$0xff]
    %v956 = vld [vmem:[%s9 + $0x184] sm:$0xf]
    %v957 = vld [vmem:[%s9 + $0x188] sm:$0xff]
    %v958 = vld [vmem:[%s9 + $0x190] sm:$0xff]
    %v959 = vld [vmem:[%s9 + $0x198] sm:$0xff]
    %v960 = vld [vmem:[%s9 + $0x1a0] sm:$0xf]
    %v961 = vld [vmem:[%s9 + $0x1a4] sm:$0xff]
    %v962 = vld [vmem:[%s9 + $0x1ac] sm:$0xff]
    %v963 = vld [vmem:[%s9 + $0x1b4] sm:$0xff]
    %v964 = vld [vmem:[%s9 + $0x1bc] sm:$0xf]
    %v965 = vld [vmem:[%s10] sm:$0x7f]
    %v967 = vlaneseq
    %v968 = vshrl.u32 %v967, 7
    %v969 = vsub.s32 0, %v968
    %v970 = vrot.slane %v965, %v969
    %v971 = vlaneseq
    %v972 = vshrl.u32 %v971, 7
    %v973 = vsub.s32 1, %v972
    %v974 = vrot.slane %v965, %v973
    %v975 = vlaneseq
    %v976 = vshrl.u32 %v975, 7
    %v977 = vsub.s32 2, %v976
    %v978 = vrot.slane %v965, %v977
    %v979 = vlaneseq
    %v980 = vshrl.u32 %v979, 7
    %v981 = vsub.s32 3, %v980
    %v982 = vrot.slane %v965, %v981
    %v983 = vlaneseq
    %v984 = vshrl.u32 %v983, 7
    %v985 = vsub.s32 4, %v984
    %v986 = vrot.slane %v965, %v985
    %v987 = vlaneseq
    %v988 = vshrl.u32 %v987, 7
    %v989 = vsub.s32 5, %v988
    %v990 = vrot.slane %v965, %v989
    %v991 = vlaneseq
    %v992 = vshrl.u32 %v991, 7
    %v993 = vsub.s32 6, %v992
    %v994 = vrot.slane %v965, %v993
    %v1066 = vunpack.c.l.b16 %v901
    %v1067 = vunpack.c.h.b16 %v901
    %v1068 = vunpack.c.l.b16 %v902
    %v1069 = vunpack.c.h.b16 %v902
    %v1070 = vunpack.c.l.b16 %v903
    %v1071 = vunpack.c.h.b16 %v903
    %v1072 = vunpack.c.l.b16 %v904
    %v1073 = vunpack.c.l.b16 %v905
    %v1074 = vunpack.c.h.b16 %v905
    %v1075 = vunpack.c.l.b16 %v906
    %v1076 = vunpack.c.h.b16 %v906
    %v1077 = vunpack.c.l.b16 %v907
    %v1078 = vunpack.c.h.b16 %v907
    %v1079 = vunpack.c.l.b16 %v908
    %v1080 = vunpack.c.l.b16 %v909
    %v1081 = vunpack.c.h.b16 %v909
    %v1082 = vunpack.c.l.b16 %v910
    %v1083 = vunpack.c.h.b16 %v910
    %v1084 = vunpack.c.l.b16 %v911
    %v1085 = vunpack.c.h.b16 %v911
    %v1086 = vunpack.c.l.b16 %v912
    %v1087 = vunpack.c.l.b16 %v913
    %v1088 = vunpack.c.h.b16 %v913
    %v1089 = vunpack.c.l.b16 %v914
    %v1090 = vunpack.c.h.b16 %v914
    %v1091 = vunpack.c.l.b16 %v915
    %v1092 = vunpack.c.h.b16 %v915
    %v1093 = vunpack.c.l.b16 %v916
    %v1094 = vunpack.c.l.b16 %v917
    %v1095 = vunpack.c.h.b16 %v917
    %v1096 = vunpack.c.l.b16 %v918
    %v1097 = vunpack.c.h.b16 %v918
    %v1098 = vunpack.c.l.b16 %v919
    %v1099 = vunpack.c.h.b16 %v919
    %v1100 = vunpack.c.l.b16 %v920
    %v1101 = vunpack.c.l.b16 %v921
    %v1102 = vunpack.c.h.b16 %v921
    %v1103 = vunpack.c.l.b16 %v922
    %v1104 = vunpack.c.h.b16 %v922
    %v1105 = vunpack.c.l.b16 %v923
    %v1106 = vunpack.c.h.b16 %v923
    %v1107 = vunpack.c.l.b16 %v924
    %v1108 = vunpack.c.l.b16 %v925
    %v1109 = vunpack.c.h.b16 %v925
    %v1110 = vunpack.c.l.b16 %v926
    %v1111 = vunpack.c.h.b16 %v926
    %v1112 = vunpack.c.l.b16 %v927
    %v1113 = vunpack.c.h.b16 %v927
    %v1114 = vunpack.c.l.b16 %v928
    %v1115 = vunpack.c.l.b16 %v929
    %v1116 = vunpack.c.h.b16 %v929
    %v1117 = vunpack.c.l.b16 %v930
    %v1118 = vunpack.c.h.b16 %v930
    %v1119 = vunpack.c.l.b16 %v931
    %v1120 = vunpack.c.h.b16 %v931
    %v1121 = vunpack.c.l.b16 %v932
    %v1122 = vunpack.c.l.b16 %v933
    %v1123 = vunpack.c.h.b16 %v933
    %v1124 = vunpack.c.l.b16 %v934
    %v1125 = vunpack.c.h.b16 %v934
    %v1126 = vunpack.c.l.b16 %v935
    %v1127 = vunpack.c.h.b16 %v935
    %v1128 = vunpack.c.l.b16 %v936
    %v1129 = vunpack.c.l.b16 %v937
    %v1130 = vunpack.c.h.b16 %v937
    %v1131 = vunpack.c.l.b16 %v938
    %v1132 = vunpack.c.h.b16 %v938
    %v1133 = vunpack.c.l.b16 %v939
    %v1134 = vunpack.c.h.b16 %v939
    %v1135 = vunpack.c.l.b16 %v940
    %v1136 = vunpack.c.l.b16 %v941
    %v1137 = vunpack.c.h.b16 %v941
    %v1138 = vunpack.c.l.b16 %v942
    %v1139 = vunpack.c.h.b16 %v942
    %v1140 = vunpack.c.l.b16 %v943
    %v1141 = vunpack.c.h.b16 %v943
    %v1142 = vunpack.c.l.b16 %v944
    %v1143 = vunpack.c.l.b16 %v945
    %v1144 = vunpack.c.h.b16 %v945
    %v1145 = vunpack.c.l.b16 %v946
    %v1146 = vunpack.c.h.b16 %v946
    %v1147 = vunpack.c.l.b16 %v947
    %v1148 = vunpack.c.h.b16 %v947
    %v1149 = vunpack.c.l.b16 %v948
    %v1150 = vunpack.c.l.b16 %v949
    %v1151 = vunpack.c.h.b16 %v949
    %v1152 = vunpack.c.l.b16 %v950
    %v1153 = vunpack.c.h.b16 %v950
    %v1154 = vunpack.c.l.b16 %v951
    %v1155 = vunpack.c.h.b16 %v951
    %v1156 = vunpack.c.l.b16 %v952
    %v1157 = vunpack.c.l.b16 %v953
    %v1158 = vunpack.c.h.b16 %v953
    %v1159 = vunpack.c.l.b16 %v954
    %v1160 = vunpack.c.h.b16 %v954
    %v1161 = vunpack.c.l.b16 %v955
    %v1162 = vunpack.c.h.b16 %v955
    %v1163 = vunpack.c.l.b16 %v956
    %v1164 = vunpack.c.l.b16 %v957
    %v1165 = vunpack.c.h.b16 %v957
    %v1166 = vunpack.c.l.b16 %v958
    %v1167 = vunpack.c.h.b16 %v958
    %v1168 = vunpack.c.l.b16 %v959
    %v1169 = vunpack.c.h.b16 %v959
    %v1170 = vunpack.c.l.b16 %v960
    %v1171 = vunpack.c.l.b16 %v961
    %v1172 = vunpack.c.h.b16 %v961
    %v1173 = vunpack.c.l.b16 %v962
    %v1174 = vunpack.c.h.b16 %v962
    %v1175 = vunpack.c.l.b16 %v963
    %v1176 = vunpack.c.h.b16 %v963
    %v1177 = vunpack.c.l.b16 %v964
    %v1178 = vpack.c.b16 %v1073, %v1066
    %v1179 = vpack.c.b16 %v1074, %v1067
    %v1180 = vpack.c.b16 %v1075, %v1068
    %v1181 = vpack.c.b16 %v1076, %v1069
    %v1182 = vpack.c.b16 %v1077, %v1070
    %v1183 = vpack.c.b16 %v1078, %v1071
    %v1184 = vpack.c.b16 %v1079, %v1072
    %v1185 = vpack.c.b16 %v1087, %v1080
    %v1186 = vpack.c.b16 %v1088, %v1081
    %v1187 = vpack.c.b16 %v1089, %v1082
    %v1188 = vpack.c.b16 %v1090, %v1083
    %v1189 = vpack.c.b16 %v1091, %v1084
    %v1190 = vpack.c.b16 %v1092, %v1085
    %v1191 = vpack.c.b16 %v1093, %v1086
    %v1192 = vpack.c.b16 %v1101, %v1094
    %v1193 = vpack.c.b16 %v1102, %v1095
    %v1194 = vpack.c.b16 %v1103, %v1096
    %v1195 = vpack.c.b16 %v1104, %v1097
    %v1196 = vpack.c.b16 %v1105, %v1098
    %v1197 = vpack.c.b16 %v1106, %v1099
    %v1198 = vpack.c.b16 %v1107, %v1100
    %v1199 = vpack.c.b16 %v1115, %v1108
    %v1200 = vpack.c.b16 %v1116, %v1109
    %v1201 = vpack.c.b16 %v1117, %v1110
    %v1202 = vpack.c.b16 %v1118, %v1111
    %v1203 = vpack.c.b16 %v1119, %v1112
    %v1204 = vpack.c.b16 %v1120, %v1113
    %v1205 = vpack.c.b16 %v1121, %v1114
    %v1206 = vpack.c.b16 %v1129, %v1122
    %v1207 = vpack.c.b16 %v1130, %v1123
    %v1208 = vpack.c.b16 %v1131, %v1124
    %v1209 = vpack.c.b16 %v1132, %v1125
    %v1210 = vpack.c.b16 %v1133, %v1126
    %v1211 = vpack.c.b16 %v1134, %v1127
    %v1212 = vpack.c.b16 %v1135, %v1128
    %v1213 = vpack.c.b16 %v1143, %v1136
    %v1214 = vpack.c.b16 %v1144, %v1137
    %v1215 = vpack.c.b16 %v1145, %v1138
    %v1216 = vpack.c.b16 %v1146, %v1139
    %v1217 = vpack.c.b16 %v1147, %v1140
    %v1218 = vpack.c.b16 %v1148, %v1141
    %v1219 = vpack.c.b16 %v1149, %v1142
    %v1220 = vpack.c.b16 %v1157, %v1150
    %v1221 = vpack.c.b16 %v1158, %v1151
    %v1222 = vpack.c.b16 %v1159, %v1152
    %v1223 = vpack.c.b16 %v1160, %v1153
    %v1224 = vpack.c.b16 %v1161, %v1154
    %v1225 = vpack.c.b16 %v1162, %v1155
    %v1226 = vpack.c.b16 %v1163, %v1156
    %v1227 = vpack.c.b16 %v1171, %v1164
    %v1228 = vpack.c.b16 %v1172, %v1165
    %v1229 = vpack.c.b16 %v1173, %v1166
    %v1230 = vpack.c.b16 %v1174, %v1167
    %v1231 = vpack.c.b16 %v1175, %v1168
    %v1232 = vpack.c.b16 %v1176, %v1169
    %v1233 = vpack.c.b16 %v1177, %v1170
    %1290 = vmatprep.subr.bf16.mxu0 %v1179
    %1291 = vmatpush1.bf16.msra.mxu0 %v1178
    %1292 = vmatprep.subr.bf16.mxu0 %v1186
    %1293 = vmatpush1.bf16.msra.mxu0 %v1185
    %1294 = vmatprep.subr.bf16.mxu0 %v1193
    %1295 = vmatpush1.bf16.msra.mxu0 %v1192
    %1296 = vmatprep.subr.bf16.mxu0 %v1200
    %1297 = vmatpush1.bf16.msra.mxu0 %v1199
    %1298 = vmatprep.subr.bf16.mxu0 %v1207
    %1299 = vmatpush1.bf16.msra.mxu0 %v1206
    %1300 = vmatprep.subr.bf16.mxu0 %v1214
    %1301 = vmatpush1.bf16.msra.mxu0 %v1213
    %1302 = vmatprep.subr.bf16.mxu0 %v1221
    %1303 = vmatpush1.bf16.msra.mxu0 %v1220
    %1304 = vmatprep.subr.bf16.mxu0 %v1228
    %1305 = vmatpush1.bf16.msra.mxu0 %v1227
    %1306 = vmatprep.subr.bf16.mxu0 0
    %1307 = vmatpush1.bf16.msra.mxu0 0
    %1308 = vmatprep.subr.bf16.mxu0 0
    %1309 = vmatpush1.bf16.msra.mxu0 0
    %1310 = vmatprep.subr.bf16.mxu0 0
    %1311 = vmatpush1.bf16.msra.mxu0 0
    %1312 = vmatprep.subr.bf16.mxu0 0
    %1313 = vmatpush1.bf16.msra.mxu0 0
    %1314 = vmatprep.subr.bf16.mxu0 0
    %1315 = vmatpush1.bf16.msra.mxu0 0
    %1316 = vmatprep.subr.bf16.mxu0 0
    %1317 = vmatpush1.bf16.msra.mxu0 0
    %1318 = vmatprep.subr.bf16.mxu0 0
    %1319 = vmatpush1.bf16.msra.mxu0 0
    %1320 = vmatprep.subr.bf16.mxu0 0
    %1321 = vmatpush1.bf16.msra.mxu0 0
    %1322 = vmatprep.mubr.bf16.mxu0 0
    %1323 = vmatmul.mubr.bf16.gmra.mrb[0].mxu0 %v900
    %v1324 = vpop.f32.mrb[0].mxu0
    %v1325 = vadd.f32 %v970, %v1324
    %v1326 = vpop.f32.mrb[0].mxu0
    %v1327 = vadd.f32 %v974, %v1326
    %v1328 = vpop.f32.mrb[0].mxu0
    %v1329 = vpop.f32.mrb[0].mxu0
    %1330 = vdwg.mxu0
    %1331 = vmatprep.subr.bf16.mxu0 %v1181
    %1332 = vmatpush1.bf16.msra.mxu0 %v1180
    %1333 = vmatprep.subr.bf16.mxu0 %v1188
    %1334 = vmatpush1.bf16.msra.mxu0 %v1187
    %1335 = vmatprep.subr.bf16.mxu0 %v1195
    %1336 = vmatpush1.bf16.msra.mxu0 %v1194
    %1337 = vmatprep.subr.bf16.mxu0 %v1202
    %1338 = vmatpush1.bf16.msra.mxu0 %v1201
    %1339 = vmatprep.subr.bf16.mxu0 %v1209
    %1340 = vmatpush1.bf16.msra.mxu0 %v1208
    %1341 = vmatprep.subr.bf16.mxu0 %v1216
    %1342 = vmatpush1.bf16.msra.mxu0 %v1215
    %1343 = vmatprep.subr.bf16.mxu0 %v1223
    %1344 = vmatpush1.bf16.msra.mxu0 %v1222
    %1345 = vmatprep.subr.bf16.mxu0 %v1230
    %1346 = vmatpush1.bf16.msra.mxu0 %v1229
    %1347 = vmatprep.subr.bf16.mxu0 0
    %1348 = vmatpush1.bf16.msra.mxu0 0
    %1349 = vmatprep.subr.bf16.mxu0 0
    %1350 = vmatpush1.bf16.msra.mxu0 0
    %1351 = vmatprep.subr.bf16.mxu0 0
    %1352 = vmatpush1.bf16.msra.mxu0 0
    %1353 = vmatprep.subr.bf16.mxu0 0
    %1354 = vmatpush1.bf16.msra.mxu0 0
    %1355 = vmatprep.subr.bf16.mxu0 0
    %1356 = vmatpush1.bf16.msra.mxu0 0
    %1357 = vmatprep.subr.bf16.mxu0 0
    %1358 = vmatpush1.bf16.msra.mxu0 0
    %1359 = vmatprep.subr.bf16.mxu0 0
    %1360 = vmatpush1.bf16.msra.mxu0 0
    %1361 = vmatprep.subr.bf16.mxu0 0
    %1362 = vmatpush1.bf16.msra.mxu0 0
    %1363 = vmatprep.mubr.bf16.mxu0 0
    %1364 = vmatmul.mubr.bf16.gmra.mrb[0].mxu0 %v900
    %v1365 = vpop.f32.mrb[0].mxu0
    %v1366 = vadd.f32 %v978, %v1365
    %v1367 = vpop.f32.mrb[0].mxu0
    %v1368 = vadd.f32 %v982, %v1367
    %v1369 = vpop.f32.mrb[0].mxu0
    %v1370 = vpop.f32.mrb[0].mxu0
    %1371 = vdwg.mxu0
    %1372 = vmatprep.subr.bf16.mxu0 %v1183
    %1373 = vmatpush1.bf16.msra.mxu0 %v1182
    %1374 = vmatprep.subr.bf16.mxu0 %v1190
    %1375 = vmatpush1.bf16.msra.mxu0 %v1189
    %1376 = vmatprep.subr.bf16.mxu0 %v1197
    %1377 = vmatpush1.bf16.msra.mxu0 %v1196
    %1378 = vmatprep.subr.bf16.mxu0 %v1204
    %1379 = vmatpush1.bf16.msra.mxu0 %v1203
    %1380 = vmatprep.subr.bf16.mxu0 %v1211
    %1381 = vmatpush1.bf16.msra.mxu0 %v1210
    %1382 = vmatprep.subr.bf16.mxu0 %v1218
    %1383 = vmatpush1.bf16.msra.mxu0 %v1217
    %1384 = vmatprep.subr.bf16.mxu0 %v1225
    %1385 = vmatpush1.bf16.msra.mxu0 %v1224
    %1386 = vmatprep.subr.bf16.mxu0 %v1232
    %1387 = vmatpush1.bf16.msra.mxu0 %v1231
    %1388 = vmatprep.subr.bf16.mxu0 0
    %1389 = vmatpush1.bf16.msra.mxu0 0
    %1390 = vmatprep.subr.bf16.mxu0 0
    %1391 = vmatpush1.bf16.msra.mxu0 0
    %1392 = vmatprep.subr.bf16.mxu0 0
    %1393 = vmatpush1.bf16.msra.mxu0 0
    %1394 = vmatprep.subr.bf16.mxu0 0
    %1395 = vmatpush1.bf16.msra.mxu0 0
    %1396 = vmatprep.subr.bf16.mxu0 0
    %1397 = vmatpush1.bf16.msra.mxu0 0
    %1398 = vmatprep.subr.bf16.mxu0 0
    %1399 = vmatpush1.bf16.msra.mxu0 0
    %1400 = vmatprep.subr.bf16.mxu0 0
    %1401 = vmatpush1.bf16.msra.mxu0 0
    %1402 = vmatprep.subr.bf16.mxu0 0
    %1403 = vmatpush1.bf16.msra.mxu0 0
    %1404 = vmatprep.mubr.bf16.mxu0 0
    %1405 = vmatmul.mubr.bf16.gmra.mrb[0].mxu0 %v900
    %v1406 = vpop.f32.mrb[0].mxu0
    %v1407 = vadd.f32 %v986, %v1406
    %v1408 = vpop.f32.mrb[0].mxu0
    %v1409 = vadd.f32 %v990, %v1408
    %v1410 = vpop.f32.mrb[0].mxu0
    %v1411 = vpop.f32.mrb[0].mxu0
    %1412 = vdwg.mxu0
    %1413 = vmatprep.subr.bf16.mxu0 0
    %1414 = vmatpush1.bf16.msra.mxu0 %v1184
    %1415 = vmatprep.subr.bf16.mxu0 0
    %1416 = vmatpush1.bf16.msra.mxu0 %v1191
    %1417 = vmatprep.subr.bf16.mxu0 0
    %1418 = vmatpush1.bf16.msra.mxu0 %v1198
    %1419 = vmatprep.subr.bf16.mxu0 0
    %1420 = vmatpush1.bf16.msra.mxu0 %v1205
    %1421 = vmatprep.subr.bf16.mxu0 0
    %1422 = vmatpush1.bf16.msra.mxu0 %v1212
    %1423 = vmatprep.subr.bf16.mxu0 0
    %1424 = vmatpush1.bf16.msra.mxu0 %v1219
    %1425 = vmatprep.subr.bf16.mxu0 0
    %1426 = vmatpush1.bf16.msra.mxu0 %v1226
    %1427 = vmatprep.subr.bf16.mxu0 0
    %1428 = vmatpush1.bf16.msra.mxu0 %v1233
    %1429 = vmatprep.subr.bf16.mxu0 0
    %1430 = vmatpush1.bf16.msra.mxu0 0
    %1431 = vmatprep.subr.bf16.mxu0 0
    %1432 = vmatpush1.bf16.msra.mxu0 0
    %1433 = vmatprep.subr.bf16.mxu0 0
    %1434 = vmatpush1.bf16.msra.mxu0 0
    %1435 = vmatprep.subr.bf16.mxu0 0
    %1436 = vmatpush1.bf16.msra.mxu0 0
    %1437 = vmatprep.subr.bf16.mxu0 0
    %1438 = vmatpush1.bf16.msra.mxu0 0
    %1439 = vmatprep.subr.bf16.mxu0 0
    %1440 = vmatpush1.bf16.msra.mxu0 0
    %1441 = vmatprep.subr.bf16.mxu0 0
    %1442 = vmatpush1.bf16.msra.mxu0 0
    %1443 = vmatprep.subr.bf16.mxu0 0
    %1444 = vmatpush1.bf16.msra.mxu0 0
    %1445 = vmatprep.mubr.bf16.mxu0 0
    %1446 = vmatmul.mubr.bf16.gmra.mrb[0].mxu0 %v900
    %v1447 = vpop.f32.mrb[0].mxu0
    %v1448 = vadd.f32 %v994, %v1447
    %v1449 = vpop.f32.mrb[0].mxu0
    %v1450 = vpop.f32.mrb[0].mxu0
    %v1451 = vpop.f32.mrb[0].mxu0
    %1452 = vdwg.mxu0
    %v1453 = vmax.f32 %v1325, -30.0
    %v1454 = vmax.f32 %v1327, -30.0
    %v1455 = vmax.f32 %v1366, -30.0
    %v1456 = vmax.f32 %v1368, -30.0
    %v1457 = vmax.f32 %v1407, -30.0
    %v1458 = vmax.f32 %v1409, -30.0
    %v1459 = vmax.f32 %v1448, -30.0
    %v1460 = vmin.f32 %v1453, 30.0
    %v1461 = vmin.f32 %v1454, 30.0
    %v1462 = vmin.f32 %v1455, 30.0
    %v1463 = vmin.f32 %v1456, 30.0
    %v1464 = vmin.f32 %v1457, 30.0
    %v1465 = vmin.f32 %v1458, 30.0
    %v1466 = vmin.f32 %v1459, 30.0
    %v1467 = vsub.f32 0.0, %v1460
    %v1468 = vsub.f32 0.0, %v1461
    %v1469 = vsub.f32 0.0, %v1462
    %v1470 = vsub.f32 0.0, %v1463
    %v1471 = vsub.f32 0.0, %v1464
    %v1472 = vsub.f32 0.0, %v1465
    %v1473 = vsub.f32 0.0, %v1466
    %v1474 = vpack.c.bf16 %v1467, %v1467
    %v1475 = vpack.c.bf16 %v1468, %v1468
    %v1476 = vpack.c.bf16 %v1469, %v1469
    %v1477 = vpack.c.bf16 %v1470, %v1470
    %v1478 = vpack.c.bf16 %v1471, %v1471
    %v1479 = vpack.c.bf16 %v1472, %v1472
    %v1480 = vpack.c.bf16 %v1473, %v1473
    %v1482 = vmul.bf16 %v1474, 1069105081
    %v1483 = vpow.bf16.pop %v1482
    %v1485 = vmul.bf16 %v1475, 1069105081
    %v1486 = vpow.bf16.pop %v1485
    %v1488 = vmul.bf16 %v1476, 1069105081
    %v1489 = vpow.bf16.pop %v1488
    %v1491 = vmul.bf16 %v1477, 1069105081
    %v1492 = vpow.bf16.pop %v1491
    %v1494 = vmul.bf16 %v1478, 1069105081
    %v1495 = vpow.bf16.pop %v1494
    %v1497 = vmul.bf16 %v1479, 1069105081
    %v1498 = vpow.bf16.pop %v1497
    %v1500 = vmul.bf16 %v1480, 1069105081
    %v1501 = vpow.bf16.pop %v1500
    %v1502 = vunpack.c.l.bf16 %v1483
    %v1503 = vunpack.c.l.bf16 %v1486
    %v1504 = vunpack.c.l.bf16 %v1489
    %v1505 = vunpack.c.l.bf16 %v1492
    %v1506 = vunpack.c.l.bf16 %v1495
    %v1507 = vunpack.c.l.bf16 %v1498
    %v1508 = vunpack.c.l.bf16 %v1501
    %v1509 = vadd.f32 %v1502, 1.0
    %v1510 = vadd.f32 %v1503, 1.0
    %v1511 = vadd.f32 %v1504, 1.0
    %v1512 = vadd.f32 %v1505, 1.0
    %v1513 = vadd.f32 %v1506, 1.0
    %v1514 = vadd.f32 %v1507, 1.0
    %v1515 = vadd.f32 %v1508, 1.0
    %v1516 = vrcp.pop %v1509
    %v1517 = vrcp.pop %v1510
    %v1518 = vrcp.pop %v1511
    %v1519 = vrcp.pop %v1512
    %v1520 = vrcp.pop %v1513
    %v1521 = vrcp.pop %v1514
    %v1522 = vrcp.pop %v1515
    %1523 = vst [vmem:[#allocation2] sm:$0xff] %v1516
    %1524 = vst [vmem:[#allocation2 + $0x8] sm:$0xff] %v1517
    %1525 = vst [vmem:[#allocation2 + $0x10] sm:$0xff] %v1518
    %1526 = vst [vmem:[#allocation2 + $0x18] sm:$0xff] %v1519
    %1527 = vst [vmem:[#allocation2 + $0x20] sm:$0xff] %v1520
    %1528 = vst [vmem:[#allocation2 + $0x28] sm:$0xff] %v1521
    %1529 = vst.msk [vmem:[#allocation2 + $0x30] sm:$0xff] %vm453, %v1522
    // Predicated region
    $region46: #{tpu_custom_call.1} parent=1 // pred_check
      _
    $region47: #{tpu_custom_call.1} parent=1 // pred_check_branch
      %1531 = sbr.rel (0) target = $region49
    $region48: #{tpu_custom_call.1} parent=1 // pred_region
      %s1533 = ssub.s32 896, 896
      %1534 = vsyncadd [#allocation3], %s1533
      %s1536 = sshll.u32 [#allocation2], 4
      %s1537 = int_to_ptr.vmem [resolvable:$true] %s1536
      %1539 = dma.vmem_to_hbm [thread:$0]  %s1537, 896, %s11, [#allocation3]
    $region49: #{tpu_custom_call.1} parent=1 // pred_fallthru
      _
    // Predicated region
    $region50: #{tpu_custom_call.1} parent=1 // pred_check
      _
    $region51: #{tpu_custom_call.1} parent=1 // pred_check_branch
      %1541 = sbr.rel (0) target = $region53
    $region52: #{tpu_custom_call.1} parent=1 // pred_region
      %1542 = dma.done [#allocation3], 896
    $region53: #{tpu_custom_call.1} parent=1 // pred_fallthru
      _
    %1543 = vsyncpa [#allocation3], 1

</llo_original>
